<compile_context>
chip_gen: v7x
topology: tpu7x:2x2x1
jax: 0.10.0
libtpu: 0.0.40
codegen_flags: <defaults>
</compile_context>

<pallas_src>
import functools

import jax
import jax.numpy as jnp
from jax.experimental import pallas as pl
from jax.experimental.pallas import tpu as pltpu

EPS_BN = 1e-5      # PyTorch BatchNorm1d default eps
EPS_NORM = 1e-12   # PyTorch F.normalize default eps


def dcloss_kernel(x_ref, w1_ref, g1_ref, b1_ref, w2_ref, g2_ref, b2_ref,
                  out_ref, *, num):
    x = x_ref[...]                                              # (B, K) f32

    # Hoisted F.normalize: (x/||x||) @ W1 == (x @ W1) * rsqrt(sum x^2) per row.
    ssq = jnp.sum(x * x, axis=-1, keepdims=True)
    inv_norm = jax.lax.rsqrt(
        jnp.maximum(ssq, jnp.float32(EPS_NORM * EPS_NORM)))

    # fc1: Linear(2048, 256, bias=False).  bf16 operands (no-op cast when the
    # weights are already stored as bf16), f32 accumulation on the MXU.
    h = jnp.dot(x.astype(jnp.bfloat16), w1_ref[...].astype(jnp.bfloat16),
                preferred_element_type=jnp.float32)
    h = h * inv_norm                                            # (B, 256) f32

    # fc2[0]: BatchNorm1d (training mode: batch mean, biased variance).
    mu = jnp.mean(h, axis=0, keepdims=True)
    var = jnp.mean((h - mu) ** 2, axis=0, keepdims=True)
    h = (h - mu) * jax.lax.rsqrt(var + EPS_BN) * g1_ref[...] + b1_ref[...]

    # fc2[1]: ReLU.
    h = jnp.maximum(h, 0.0)

    # fc2[2]: Linear(256, 256).  Its bias is exactly cancelled by the next
    # training-mode BatchNorm's batch-mean subtraction -> not a kernel input.
    h = jnp.dot(h.astype(jnp.bfloat16), w2_ref[...].astype(jnp.bfloat16),
                preferred_element_type=jnp.float32)

    # fc2[3]: BatchNorm1d.
    mu2 = jnp.mean(h, axis=0, keepdims=True)
    var2 = jnp.mean((h - mu2) ** 2, axis=0, keepdims=True)
    h = (h - mu2) * jax.lax.rsqrt(var2 + EPS_BN) * g2_ref[...] + b2_ref[...]

    # Second F.normalize (rsqrt * mul form).
    ss2 = jnp.sum(h * h, axis=-1, keepdims=True)
    h = h * jax.lax.rsqrt(jnp.maximum(ss2, jnp.float32(EPS_NORM * EPS_NORM)))

    # loss = sum_{i<j} mean_row ||h[group_i] - h[group_j]||_2
    # Whole-array sublane rolls: for shift s, every row pairs with the matching
    # row of the group s positions away (mod num).  Summing the per-row norms
    # over shifts 1..num-1 counts every unordered group pair exactly twice
    # across all `num` groups -> scale by num/2.
    batch = h.shape[0]
    grp = batch // num
    total = jnp.float32(0.0)
    # TODO(synk): if `num` can grow large, restructure to masked (num, grp, D)
    # reductions to keep the unrolled tail code size / vreg pressure flat.
    for s in range(1, num):                                     # static unroll
        d = h - pltpu.roll(h, shift=s * grp, axis=0)
        dn = jnp.sqrt(jnp.sum(d * d, axis=-1, keepdims=True))   # (B, 1)
        total = total + jnp.mean(dn)
    out_ref[0] = total * jnp.float32(0.5 * num)


def dc_loss(x, w1, g1, b1, w2, bl2, g2, b2, *, num=2):
    """DCLoss forward.

    x: (B, 2048) f32; w1: (2048, 256), w2: (256, 256) stored as (in, out) and
    ideally pre-cast (once, at init) to bf16; BN gamma/beta as (256,) or
    (1, 256).  bl2 (fc2 Linear bias) is accepted for API fidelity but has no
    effect on the output (it is cancelled by the following training-mode
    BatchNorm) and is not passed to the kernel.
    """
    del bl2
    B, K = x.shape
    D = w1.shape[1]
    if B % num != 0:
        raise ValueError("batch must be divisible by num (equal-size groups)")

    x = jnp.asarray(x, jnp.float32)
    g1 = jnp.reshape(jnp.asarray(g1, jnp.float32), (1, D))
    b1 = jnp.reshape(jnp.asarray(b1, jnp.float32), (1, D))
    g2 = jnp.reshape(jnp.asarray(g2, jnp.float32), (1, D))
    b2 = jnp.reshape(jnp.asarray(b2, jnp.float32), (1, D))

    cost = pl.CostEstimate(
        flops=2 * B * K * D + 2 * B * D * D,
        transcendentals=(4 + (num - 1)) * B + 2 * D,
        bytes_accessed=(x.size * 4
                        + w1.size * w1.dtype.itemsize
                        + w2.size * w2.dtype.itemsize
                        + 4 * D * 4 + 4),
    )

    vmem = pltpu.MemorySpace.VMEM
    out = pl.pallas_call(
        functools.partial(dcloss_kernel, num=num),
        out_shape=jax.ShapeDtypeStruct((1,), jnp.float32),
        in_specs=[pl.BlockSpec(memory_space=vmem) for _ in range(7)],
        out_specs=pl.BlockSpec(memory_space=pltpu.MemorySpace.SMEM),
        cost_estimate=cost,
    )(x, w1, g1, b1, w2, g2, b2)
    return out[0]


if __name__ == "__main__":
    B, D_IN, D_HID, NUM = 8, 2048, 256, 2   # fc1 requires 2048 input features

    key = jax.random.PRNGKey(0)
    k_x, k_w1, k_w2, k_b = jax.random.split(key, 4)

    x = jax.random.normal(k_x, (B, D_IN), dtype=jnp.float32)

    # Deterministic synthetic parameters (shapes from __init__).  Weights are
    # cast to bf16 ONCE here (persistent parameter storage), NOT per-call in
    # the wrapper, so the dominant w1 HBM stream is actually halved.
    w1 = (jax.random.normal(k_w1, (D_IN, D_HID), jnp.float32)
          / jnp.sqrt(D_IN)).astype(jnp.bfloat16)
    g1 = jnp.ones((1, D_HID), jnp.float32)
    b1 = jnp.zeros((1, D_HID), jnp.float32)
    w2 = (jax.random.normal(k_w2, (D_HID, D_HID), jnp.float32)
          / jnp.sqrt(D_HID)).astype(jnp.bfloat16)
    bl2 = jax.random.normal(k_b, (1, D_HID), jnp.float32) * 0.01
    g2 = jnp.ones((1, D_HID), jnp.float32)
    b2 = jnp.zeros((1, D_HID), jnp.float32)

    loss = dc_loss(x, w1, g1, b1, w2, bl2, g2, b2, num=NUM)
    jax.block_until_ready(loss)
    print("KERNEL_OK")
</pallas_src>

<mosaic_0001>
module attributes {stable_mosaic.version = 11 : i64} {
  func.func @dcloss_kernel(%arg0: memref<8x2048xf32, #tpu.memory_space<vmem>>, %arg1: memref<2048x256xbf16, #tpu.memory_space<vmem>>, %arg2: memref<1x256xf32, #tpu.memory_space<vmem>>, %arg3: memref<1x256xf32, #tpu.memory_space<vmem>>, %arg4: memref<256x256xbf16, #tpu.memory_space<vmem>>, %arg5: memref<1x256xf32, #tpu.memory_space<vmem>>, %arg6: memref<1x256xf32, #tpu.memory_space<vmem>>, %arg7: memref<1xf32, #tpu.memory_space<smem>>) attributes {dimension_semantics = [], scalar_prefetch = 0 : i64, scratch_operands = 0 : i64, tpu.core_type = #tpu.core_type<tc>} {
    %c0 = arith.constant 0 : index
    %c0_0 = arith.constant 0 : index
    %0 = vector.load %arg0[%c0, %c0_0] : memref<8x2048xf32, #tpu.memory_space<vmem>>, vector<8x2048xf32>
    %1 = arith.mulf %0, %0 : vector<8x2048xf32>
    %cst = arith.constant dense<0.000000e+00> : vector<8xf32>
    %2 = vector.multi_reduction <add>, %1, %cst [1] : vector<8x2048xf32> to vector<8xf32>
    %3 = vector.shape_cast %2 : vector<8xf32> to vector<8x1xf32>
    %cst_1 = arith.constant 1.000000e-24 : f32
    %4 = vector.broadcast %cst_1 : f32 to vector<8x1xf32>
    %5 = arith.maximumf %3, %4 : vector<8x1xf32>
    %6 = math.rsqrt %5 : vector<8x1xf32>
    %7 = arith.truncf %0 : vector<8x2048xf32> to vector<8x2048xbf16>
    %c0_2 = arith.constant 0 : index
    %c0_3 = arith.constant 0 : index
    %8 = vector.load %arg1[%c0_2, %c0_3] : memref<2048x256xbf16, #tpu.memory_space<vmem>>, vector<2048x256xbf16>
    %cst_4 = arith.constant dense<0.000000e+00> : vector<8x256xf32>
    %9 = tpu.matmul %7, %8, %cst_4 {dimension_numbers = #tpu.dot_dimension_numbers<[1], [0], [0], [1], [0, 0, 1, 1], [], []>} : vector<8x2048xbf16>, vector<2048x256xbf16>, vector<8x256xf32> -> vector<8x256xf32>
    %10 = vector.broadcast %6 : vector<8x1xf32> to vector<8x256xf32>
    %11 = arith.mulf %9, %10 : vector<8x256xf32>
    %cst_5 = arith.constant dense<0.000000e+00> : vector<256xf32>
    %12 = vector.multi_reduction <add>, %11, %cst_5 [0] : vector<8x256xf32> to vector<256xf32>
    %13 = vector.shape_cast %12 : vector<256xf32> to vector<1x256xf32>
    %cst_6 = arith.constant 8.000000e+00 : f32
    %14 = vector.broadcast %cst_6 : f32 to vector<1x256xf32>
    %15 = arith.divf %13, %14 : vector<1x256xf32>
    %16 = vector.broadcast %15 : vector<1x256xf32> to vector<8x256xf32>
    %17 = arith.subf %11, %16 : vector<8x256xf32>
    %18 = arith.mulf %17, %17 : vector<8x256xf32>
    %cst_7 = arith.constant dense<0.000000e+00> : vector<256xf32>
    %19 = vector.multi_reduction <add>, %18, %cst_7 [0] : vector<8x256xf32> to vector<256xf32>
    %20 = vector.shape_cast %19 : vector<256xf32> to vector<1x256xf32>
    %cst_8 = arith.constant 8.000000e+00 : f32
    %21 = vector.broadcast %cst_8 : f32 to vector<1x256xf32>
    %22 = arith.divf %20, %21 : vector<1x256xf32>
    %23 = vector.broadcast %15 : vector<1x256xf32> to vector<8x256xf32>
    %24 = arith.subf %11, %23 : vector<8x256xf32>
    %cst_9 = arith.constant 9.99999974E-6 : f32
    %25 = vector.broadcast %cst_9 : f32 to vector<1x256xf32>
    %26 = arith.addf %22, %25 : vector<1x256xf32>
    %27 = math.rsqrt %26 : vector<1x256xf32>
    %28 = vector.broadcast %27 : vector<1x256xf32> to vector<8x256xf32>
    %29 = arith.mulf %24, %28 : vector<8x256xf32>
    %c0_10 = arith.constant 0 : index
    %c0_11 = arith.constant 0 : index
    %30 = vector.load %arg2[%c0_10, %c0_11] : memref<1x256xf32, #tpu.memory_space<vmem>>, vector<1x256xf32>
    %31 = vector.broadcast %30 : vector<1x256xf32> to vector<8x256xf32>
    %32 = arith.mulf %29, %31 : vector<8x256xf32>
    %c0_12 = arith.constant 0 : index
    %c0_13 = arith.constant 0 : index
    %33 = vector.load %arg3[%c0_12, %c0_13] : memref<1x256xf32, #tpu.memory_space<vmem>>, vector<1x256xf32>
    %34 = vector.broadcast %33 : vector<1x256xf32> to vector<8x256xf32>
    %35 = arith.addf %32, %34 : vector<8x256xf32>
    %cst_14 = arith.constant 0.000000e+00 : f32
    %36 = vector.broadcast %cst_14 : f32 to vector<8x256xf32>
    %37 = arith.maximumf %35, %36 : vector<8x256xf32>
    %38 = arith.truncf %37 : vector<8x256xf32> to vector<8x256xbf16>
    %c0_15 = arith.constant 0 : index
    %c0_16 = arith.constant 0 : index
    %39 = vector.load %arg4[%c0_15, %c0_16] : memref<256x256xbf16, #tpu.memory_space<vmem>>, vector<256x256xbf16>
    %cst_17 = arith.constant dense<0.000000e+00> : vector<8x256xf32>
    %40 = tpu.matmul %38, %39, %cst_17 {dimension_numbers = #tpu.dot_dimension_numbers<[1], [0], [0], [1], [0, 0, 1, 1], [], []>} : vector<8x256xbf16>, vector<256x256xbf16>, vector<8x256xf32> -> vector<8x256xf32>
    %cst_18 = arith.constant dense<0.000000e+00> : vector<256xf32>
    %41 = vector.multi_reduction <add>, %40, %cst_18 [0] : vector<8x256xf32> to vector<256xf32>
    %42 = vector.shape_cast %41 : vector<256xf32> to vector<1x256xf32>
    %cst_19 = arith.constant 8.000000e+00 : f32
    %43 = vector.broadcast %cst_19 : f32 to vector<1x256xf32>
    %44 = arith.divf %42, %43 : vector<1x256xf32>
    %45 = vector.broadcast %44 : vector<1x256xf32> to vector<8x256xf32>
    %46 = arith.subf %40, %45 : vector<8x256xf32>
    %47 = arith.mulf %46, %46 : vector<8x256xf32>
    %cst_20 = arith.constant dense<0.000000e+00> : vector<256xf32>
    %48 = vector.multi_reduction <add>, %47, %cst_20 [0] : vector<8x256xf32> to vector<256xf32>
    %49 = vector.shape_cast %48 : vector<256xf32> to vector<1x256xf32>
    %cst_21 = arith.constant 8.000000e+00 : f32
    %50 = vector.broadcast %cst_21 : f32 to vector<1x256xf32>
    %51 = arith.divf %49, %50 : vector<1x256xf32>
    %52 = vector.broadcast %44 : vector<1x256xf32> to vector<8x256xf32>
    %53 = arith.subf %40, %52 : vector<8x256xf32>
    %cst_22 = arith.constant 9.99999974E-6 : f32
    %54 = vector.broadcast %cst_22 : f32 to vector<1x256xf32>
    %55 = arith.addf %51, %54 : vector<1x256xf32>
    %56 = math.rsqrt %55 : vector<1x256xf32>
    %57 = vector.broadcast %56 : vector<1x256xf32> to vector<8x256xf32>
    %58 = arith.mulf %53, %57 : vector<8x256xf32>
    %c0_23 = arith.constant 0 : index
    %c0_24 = arith.constant 0 : index
    %59 = vector.load %arg5[%c0_23, %c0_24] : memref<1x256xf32, #tpu.memory_space<vmem>>, vector<1x256xf32>
    %60 = vector.broadcast %59 : vector<1x256xf32> to vector<8x256xf32>
    %61 = arith.mulf %58, %60 : vector<8x256xf32>
    %c0_25 = arith.constant 0 : index
    %c0_26 = arith.constant 0 : index
    %62 = vector.load %arg6[%c0_25, %c0_26] : memref<1x256xf32, #tpu.memory_space<vmem>>, vector<1x256xf32>
    %63 = vector.broadcast %62 : vector<1x256xf32> to vector<8x256xf32>
    %64 = arith.addf %61, %63 : vector<8x256xf32>
    %65 = arith.mulf %64, %64 : vector<8x256xf32>
    %cst_27 = arith.constant dense<0.000000e+00> : vector<8xf32>
    %66 = vector.multi_reduction <add>, %65, %cst_27 [1] : vector<8x256xf32> to vector<8xf32>
    %67 = vector.shape_cast %66 : vector<8xf32> to vector<8x1xf32>
    %cst_28 = arith.constant 1.000000e-24 : f32
    %68 = vector.broadcast %cst_28 : f32 to vector<8x1xf32>
    %69 = arith.maximumf %67, %68 : vector<8x1xf32>
    %70 = math.rsqrt %69 : vector<8x1xf32>
    %71 = vector.broadcast %70 : vector<8x1xf32> to vector<8x256xf32>
    %72 = arith.mulf %64, %71 : vector<8x256xf32>
    %c4_i32 = arith.constant 4 : i32
    %73 = tpu.dynamic_rotate %72 by %c4_i32 dim 0 : vector<8x256xf32>, i32 -> vector<8x256xf32>
    %74 = arith.subf %72, %73 : vector<8x256xf32>
    %75 = arith.mulf %74, %74 : vector<8x256xf32>
    %cst_29 = arith.constant dense<0.000000e+00> : vector<8xf32>
    %76 = vector.multi_reduction <add>, %75, %cst_29 [1] : vector<8x256xf32> to vector<8xf32>
    %77 = vector.shape_cast %76 : vector<8xf32> to vector<8x1xf32>
    %78 = math.sqrt %77 : vector<8x1xf32>
    %79 = vector.shape_cast %78 : vector<8x1xf32> to vector<1x8x1xf32>
    %cst_30 = arith.constant dense<0.000000e+00> : vector<1xf32>
    %80 = vector.multi_reduction <add>, %79, %cst_30 [1, 2] : vector<1x8x1xf32> to vector<1xf32>
    %81 = vector.shape_cast %80 : vector<1xf32> to vector<1x1x1xf32>
    %82 = vector.extract %81[0, 0, 0] : f32 from vector<1x1x1xf32>
    %cst_31 = arith.constant 8.000000e+00 : f32
    %83 = arith.divf %82, %cst_31 : f32
    %cst_32 = arith.constant 0.000000e+00 : f32
    %84 = arith.addf %cst_32, %83 : f32
    %cst_33 = arith.constant 1.000000e+00 : f32
    %85 = arith.mulf %84, %cst_33 : f32
    %c0_34 = arith.constant 0 : index
    %86 = memref.load %arg7[%c0_34] : memref<1xf32, #tpu.memory_space<smem>>
    memref.store %85, %arg7[%c0_34] : memref<1xf32, #tpu.memory_space<smem>>
    return
  }
}

</mosaic_0001>

<llo_original>
// kernel: tpu_custom_call.1
$region0: #{tpu_custom_call.1}
  #allocation0 [shape = 'u32[]', space=smem, size = 0x4, offset = 0x4, fixed_abs, tag = 'smem constant byte address 0x4 - core index']
  #allocation1 [shape = 'u32[144,128]{1,0:T(1,128)}', space=vmem, size = 0x12000, scoped, tag = 'internal scratch']
  %s0 = inlined_call_operand.hbm [shape: f32[8,2048], index: 0, kind: input, shape index: {}]
  %s1 = inlined_call_operand.hbm [shape: bf16[2048,256], index: 1, kind: input, shape index: {}]
  %s2 = inlined_call_operand.vmem [shape: f32[1,256], index: 2, kind: input, shape index: {}]
  %s3 = inlined_call_operand.vmem [shape: f32[1,256], index: 3, kind: input, shape index: {}]
  %s4 = inlined_call_operand.hbm [shape: bf16[256,256], index: 4, kind: input, shape index: {}]
  %s5 = inlined_call_operand.vmem [shape: f32[1,256], index: 5, kind: input, shape index: {}]
  %s6 = inlined_call_operand.vmem [shape: f32[1,256], index: 6, kind: input, shape index: {}]
  %s7 = inlined_call_operand.hbm [shape: f32[1], index: 7, kind: output, shape index: {}]
  %s8 = sld [smem:[#allocation0]]
  $region50: #{tpu_custom_call.1} parent=0
    _
  %s10 = ssub.s32 1, %s8
  %s11 = scalar_select 0, %s10, %s8
  $region1: #{tpu_custom_call.1} parent=0
    #allocation2 [shape = 'u8[65536]{0}', space=vmem, size = 0x10000, scoped, tag = 'input window, operand 0, single buffered']
    #allocation3 [shape = 's32[1]{0}', space=sflag, size = 0x4, scoped, tag = 'scoped memory for tpu_custom_call.1']
    #allocation4 [shape = 's32[1]{0}', space=sflag, size = 0x4, scoped, tag = 'scoped memory for tpu_custom_call.1']
    #allocation5 [shape = 'u8[1048576]{0}', space=vmem, size = 0x100000, scoped, tag = 'input window, operand 1, single buffered']
    #allocation6 [shape = 's32[1]{0}', space=sflag, size = 0x4, scoped, tag = 'scoped memory for tpu_custom_call.1']
    #allocation7 [shape = 'u8[131072]{0}', space=vmem, size = 0x20000, scoped, tag = 'input window, operand 4, single buffered']
    #allocation8 [shape = 'u8[512]{0}', space=smem, size = 0x200, scoped, tag = 'output window, operand 0, single buffered']
    %12 = vsyncpa [#allocation3], 0
    %13 = vsyncpa [#allocation6], 0
    %14 = vsyncpa [#allocation4], 0
    // Predicated region
    $region2: #{tpu_custom_call.1} parent=1 // pred_check
      _
    $region3: #{tpu_custom_call.1} parent=1 // pred_check_branch
      %16 = sbr.rel (0) target = $region5
    $region4: #{tpu_custom_call.1} parent=1 // pred_region
      %s18 = ssub.s32 2048, 2048
      %19 = vsyncadd [#allocation3], %s18
      %s21 = sshll.u32 [#allocation2], 4
      %s22 = int_to_ptr.vmem [resolvable:$true] %s21
      %24 = dma.hbm_to_vmem [thread:$0]  %s0, 2048, %s22, [#allocation3]
    $region5: #{tpu_custom_call.1} parent=1 // pred_fallthru
      _
    // Predicated region
    $region6: #{tpu_custom_call.1} parent=1 // pred_check
      _
    $region7: #{tpu_custom_call.1} parent=1 // pred_check_branch
      %26 = sbr.rel (0) target = $region9
    $region8: #{tpu_custom_call.1} parent=1 // pred_region
      %s28 = ssub.s32 32768, 32768
      %29 = vsyncadd [#allocation6], %s28
      %s30 = sshll.u32 [#allocation5], 4
      %s31 = int_to_ptr.vmem [resolvable:$true] %s30
      %36 = dma.hbm_to_vmem [thread:$0]  %s1, 32768, %s31, [#allocation6], 128, 128, 8
    $region9: #{tpu_custom_call.1} parent=1 // pred_fallthru
      _
    // Predicated region
    $region10: #{tpu_custom_call.1} parent=1 // pred_check
      _
    $region11: #{tpu_custom_call.1} parent=1 // pred_check_branch
      %38 = sbr.rel (0) target = $region13
    $region12: #{tpu_custom_call.1} parent=1 // pred_region
      _
    $region13: #{tpu_custom_call.1} parent=1 // pred_fallthru
      _
    // Predicated region
    $region14: #{tpu_custom_call.1} parent=1 // pred_check
      _
    $region15: #{tpu_custom_call.1} parent=1 // pred_check_branch
      %40 = sbr.rel (0) target = $region17
    $region16: #{tpu_custom_call.1} parent=1 // pred_region
      _
    $region17: #{tpu_custom_call.1} parent=1 // pred_fallthru
      _
    // Predicated region
    $region18: #{tpu_custom_call.1} parent=1 // pred_check
      _
    $region19: #{tpu_custom_call.1} parent=1 // pred_check_branch
      %42 = sbr.rel (0) target = $region21
    $region20: #{tpu_custom_call.1} parent=1 // pred_region
      %s44 = ssub.s32 4096, 4096
      %45 = vsyncadd [#allocation6], %s44
      %s46 = sshll.u32 [#allocation7], 4
      %s47 = int_to_ptr.vmem [resolvable:$true] %s46
      %52 = dma.hbm_to_vmem [thread:$0]  %s4, 4096, %s47, [#allocation6], 128, 128, 8
    $region21: #{tpu_custom_call.1} parent=1 // pred_fallthru
      _
    // Predicated region
    $region22: #{tpu_custom_call.1} parent=1 // pred_check
      _
    $region23: #{tpu_custom_call.1} parent=1 // pred_check_branch
      %54 = sbr.rel (0) target = $region25
    $region24: #{tpu_custom_call.1} parent=1 // pred_region
      _
    $region25: #{tpu_custom_call.1} parent=1 // pred_fallthru
      _
    // Predicated region
    $region26: #{tpu_custom_call.1} parent=1 // pred_check
      _
    $region27: #{tpu_custom_call.1} parent=1 // pred_check_branch
      %56 = sbr.rel (0) target = $region29
    $region28: #{tpu_custom_call.1} parent=1 // pred_region
      _
    $region29: #{tpu_custom_call.1} parent=1 // pred_fallthru
      _
    // Predicated region
    $region30: #{tpu_custom_call.1} parent=1 // pred_check
      _
    $region31: #{tpu_custom_call.1} parent=1 // pred_check_branch
      %58 = sbr.rel (0) target = $region33
    $region32: #{tpu_custom_call.1} parent=1 // pred_region
      %59 = dma.done [#allocation3], 2048
    $region33: #{tpu_custom_call.1} parent=1 // pred_fallthru
      _
    // Predicated region
    $region34: #{tpu_custom_call.1} parent=1 // pred_check
      _
    $region35: #{tpu_custom_call.1} parent=1 // pred_check_branch
      %61 = sbr.rel (0) target = $region37
    $region36: #{tpu_custom_call.1} parent=1 // pred_region
      %62 = dma.done [#allocation6], 32768
    $region37: #{tpu_custom_call.1} parent=1 // pred_fallthru
      _
    // Predicated region
    $region38: #{tpu_custom_call.1} parent=1 // pred_check
      _
    $region39: #{tpu_custom_call.1} parent=1 // pred_check_branch
      %64 = sbr.rel (0) target = $region41
    $region40: #{tpu_custom_call.1} parent=1 // pred_region
      %65 = dma.done [#allocation6], 4096
    $region41: #{tpu_custom_call.1} parent=1 // pred_fallthru
      _
    %v66 = vld [vmem:[#allocation2] sm:$0xff]
    %v67 = vld [vmem:[#allocation2 + $0x8] sm:$0xff]
    %v68 = vld [vmem:[#allocation2 + $0x10] sm:$0xff]
    %v69 = vld [vmem:[#allocation2 + $0x18] sm:$0xff]
    %v70 = vld [vmem:[#allocation2 + $0x20] sm:$0xff]
    %v71 = vld [vmem:[#allocation2 + $0x28] sm:$0xff]
    %v72 = vld [vmem:[#allocation2 + $0x30] sm:$0xff]
    %v73 = vld [vmem:[#allocation2 + $0x38] sm:$0xff]
    %v74 = vld [vmem:[#allocation2 + $0x40] sm:$0xff]
    %v75 = vld [vmem:[#allocation2 + $0x48] sm:$0xff]
    %v76 = vld [vmem:[#allocation2 + $0x50] sm:$0xff]
    %v77 = vld [vmem:[#allocation2 + $0x58] sm:$0xff]
    %v78 = vld [vmem:[#allocation2 + $0x60] sm:$0xff]
    %v79 = vld [vmem:[#allocation2 + $0x68] sm:$0xff]
    %v80 = vld [vmem:[#allocation2 + $0x70] sm:$0xff]
    %v81 = vld [vmem:[#allocation2 + $0x78] sm:$0xff]
    %v82 = vmul.f32 %v66, %v66
    %v83 = vmul.f32 %v67, %v67
    %v84 = vmul.f32 %v68, %v68
    %v85 = vmul.f32 %v69, %v69
    %v86 = vmul.f32 %v70, %v70
    %v87 = vmul.f32 %v71, %v71
    %v88 = vmul.f32 %v72, %v72
    %v89 = vmul.f32 %v73, %v73
    %v90 = vmul.f32 %v74, %v74
    %v91 = vmul.f32 %v75, %v75
    %v92 = vmul.f32 %v76, %v76
    %v93 = vmul.f32 %v77, %v77
    %v94 = vmul.f32 %v78, %v78
    %v95 = vmul.f32 %v79, %v79
    %v96 = vmul.f32 %v80, %v80
    %v97 = vmul.f32 %v81, %v81
    %v98 = vadd.f32 %v82, %v83
    %v99 = vadd.f32 %v98, %v84
    %v100 = vadd.f32 %v99, %v85
    %v101 = vadd.f32 %v100, %v86
    %v102 = vadd.f32 %v101, %v87
    %v103 = vadd.f32 %v102, %v88
    %v104 = vadd.f32 %v103, %v89
    %v105 = vadd.f32 %v104, %v90
    %v106 = vadd.f32 %v105, %v91
    %v107 = vadd.f32 %v106, %v92
    %v108 = vadd.f32 %v107, %v93
    %v109 = vadd.f32 %v108, %v94
    %v110 = vadd.f32 %v109, %v95
    %v111 = vadd.f32 %v110, %v96
    %v112 = vadd.f32 %v111, %v97
    %113 = vadd.xlane.f32.xlu0 %v112
    %v114 = vpop.xlane.xlu0 %113
    %v115 = vmax.f32 %v114, 1e-24
    %v116 = vrsqrt.pop %v115
    %v117 = vpack.c.bf16 %v66, %v66
    %v118 = vpack.c.bf16 %v67, %v67
    %v119 = vpack.c.bf16 %v68, %v68
    %v120 = vpack.c.bf16 %v69, %v69
    %v121 = vpack.c.bf16 %v70, %v70
    %v122 = vpack.c.bf16 %v71, %v71
    %v123 = vpack.c.bf16 %v72, %v72
    %v124 = vpack.c.bf16 %v73, %v73
    %v125 = vpack.c.bf16 %v74, %v74
    %v126 = vpack.c.bf16 %v75, %v75
    %v127 = vpack.c.bf16 %v76, %v76
    %v128 = vpack.c.bf16 %v77, %v77
    %v129 = vpack.c.bf16 %v78, %v78
    %v130 = vpack.c.bf16 %v79, %v79
    %v131 = vpack.c.bf16 %v80, %v80
    %v132 = vpack.c.bf16 %v81, %v81
    %v133 = vld [vmem:[#allocation5] sm:$0xff]
    %v134 = vld [vmem:[#allocation5 + $0x8] sm:$0xff]
    %v135 = vld [vmem:[#allocation5 + $0x10] sm:$0xff]
    %v136 = vld [vmem:[#allocation5 + $0x18] sm:$0xff]
    %v137 = vld [vmem:[#allocation5 + $0x20] sm:$0xff]
    %v138 = vld [vmem:[#allocation5 + $0x28] sm:$0xff]
    %v139 = vld [vmem:[#allocation5 + $0x30] sm:$0xff]
    %v140 = vld [vmem:[#allocation5 + $0x38] sm:$0xff]
    %v141 = vld [vmem:[#allocation5 + $0x40] sm:$0xff]
    %v142 = vld [vmem:[#allocation5 + $0x48] sm:$0xff]
    %v143 = vld [vmem:[#allocation5 + $0x50] sm:$0xff]
    %v144 = vld [vmem:[#allocation5 + $0x58] sm:$0xff]
    %v145 = vld [vmem:[#allocation5 + $0x60] sm:$0xff]
    %v146 = vld [vmem:[#allocation5 + $0x68] sm:$0xff]
    %v147 = vld [vmem:[#allocation5 + $0x70] sm:$0xff]
    %v148 = vld [vmem:[#allocation5 + $0x78] sm:$0xff]
    %v149 = vld [vmem:[#allocation5 + $0x80] sm:$0xff]
    %v150 = vld [vmem:[#allocation5 + $0x88] sm:$0xff]
    %v151 = vld [vmem:[#allocation5 + $0x90] sm:$0xff]
    %v152 = vld [vmem:[#allocation5 + $0x98] sm:$0xff]
    %v153 = vld [vmem:[#allocation5 + $0xa0] sm:$0xff]
    %v154 = vld [vmem:[#allocation5 + $0xa8] sm:$0xff]
    %v155 = vld [vmem:[#allocation5 + $0xb0] sm:$0xff]
    %v156 = vld [vmem:[#allocation5 + $0xb8] sm:$0xff]
    %v157 = vld [vmem:[#allocation5 + $0xc0] sm:$0xff]
    %v158 = vld [vmem:[#allocation5 + $0xc8] sm:$0xff]
    %v159 = vld [vmem:[#allocation5 + $0xd0] sm:$0xff]
    %v160 = vld [vmem:[#allocation5 + $0xd8] sm:$0xff]
    %v161 = vld [vmem:[#allocation5 + $0xe0] sm:$0xff]
    %v162 = vld [vmem:[#allocation5 + $0xe8] sm:$0xff]
    %v163 = vld [vmem:[#allocation5 + $0xf0] sm:$0xff]
    %v164 = vld [vmem:[#allocation5 + $0xf8] sm:$0xff]
    %v165 = vld [vmem:[#allocation5 + $0x100] sm:$0xff]
    %v166 = vld [vmem:[#allocation5 + $0x108] sm:$0xff]
    %v167 = vld [vmem:[#allocation5 + $0x110] sm:$0xff]
    %v168 = vld [vmem:[#allocation5 + $0x118] sm:$0xff]
    %v169 = vld [vmem:[#allocation5 + $0x120] sm:$0xff]
    %v170 = vld [vmem:[#allocation5 + $0x128] sm:$0xff]
    %v171 = vld [vmem:[#allocation5 + $0x130] sm:$0xff]
    %v172 = vld [vmem:[#allocation5 + $0x138] sm:$0xff]
    %v173 = vld [vmem:[#allocation5 + $0x140] sm:$0xff]
    %v174 = vld [vmem:[#allocation5 + $0x148] sm:$0xff]
    %v175 = vld [vmem:[#allocation5 + $0x150] sm:$0xff]
    %v176 = vld [vmem:[#allocation5 + $0x158] sm:$0xff]
    %v177 = vld [vmem:[#allocation5 + $0x160] sm:$0xff]
    %v178 = vld [vmem:[#allocation5 + $0x168] sm:$0xff]
    %v179 = vld [vmem:[#allocation5 + $0x170] sm:$0xff]
    %v180 = vld [vmem:[#allocation5 + $0x178] sm:$0xff]
    %v181 = vld [vmem:[#allocation5 + $0x180] sm:$0xff]
    %v182 = vld [vmem:[#allocation5 + $0x188] sm:$0xff]
    %v183 = vld [vmem:[#allocation5 + $0x190] sm:$0xff]
    %v184 = vld [vmem:[#allocation5 + $0x198] sm:$0xff]
    %v185 = vld [vmem:[#allocation5 + $0x1a0] sm:$0xff]
    %v186 = vld [vmem:[#allocation5 + $0x1a8] sm:$0xff]
    %v187 = vld [vmem:[#allocation5 + $0x1b0] sm:$0xff]
    %v188 = vld [vmem:[#allocation5 + $0x1b8] sm:$0xff]
    %v189 = vld [vmem:[#allocation5 + $0x1c0] sm:$0xff]
    %v190 = vld [vmem:[#allocation5 + $0x1c8] sm:$0xff]
    %v191 = vld [vmem:[#allocation5 + $0x1d0] sm:$0xff]
    %v192 = vld [vmem:[#allocation5 + $0x1d8] sm:$0xff]
    %v193 = vld [vmem:[#allocation5 + $0x1e0] sm:$0xff]
    %v194 = vld [vmem:[#allocation5 + $0x1e8] sm:$0xff]
    %v195 = vld [vmem:[#allocation5 + $0x1f0] sm:$0xff]
    %v196 = vld [vmem:[#allocation5 + $0x1f8] sm:$0xff]
    %v197 = vld [vmem:[#allocation5 + $0x200] sm:$0xff]
    %v198 = vld [vmem:[#allocation5 + $0x208] sm:$0xff]
    %v199 = vld [vmem:[#allocation5 + $0x210] sm:$0xff]
    %v200 = vld [vmem:[#allocation5 + $0x218] sm:$0xff]
    %v201 = vld [vmem:[#allocation5 + $0x220] sm:$0xff]
    %v202 = vld [vmem:[#allocation5 + $0x228] sm:$0xff]
    %v203 = vld [vmem:[#allocation5 + $0x230] sm:$0xff]
    %v204 = vld [vmem:[#allocation5 + $0x238] sm:$0xff]
    %v205 = vld [vmem:[#allocation5 + $0x240] sm:$0xff]
    %v206 = vld [vmem:[#allocation5 + $0x248] sm:$0xff]
    %v207 = vld [vmem:[#allocation5 + $0x250] sm:$0xff]
    %v208 = vld [vmem:[#allocation5 + $0x258] sm:$0xff]
    %v209 = vld [vmem:[#allocation5 + $0x260] sm:$0xff]
    %v210 = vld [vmem:[#allocation5 + $0x268] sm:$0xff]
    %v211 = vld [vmem:[#allocation5 + $0x270] sm:$0xff]
    %v212 = vld [vmem:[#allocation5 + $0x278] sm:$0xff]
    %v213 = vld [vmem:[#allocation5 + $0x280] sm:$0xff]
    %v214 = vld [vmem:[#allocation5 + $0x288] sm:$0xff]
    %v215 = vld [vmem:[#allocation5 + $0x290] sm:$0xff]
    %v216 = vld [vmem:[#allocation5 + $0x298] sm:$0xff]
    %v217 = vld [vmem:[#allocation5 + $0x2a0] sm:$0xff]
    %v218 = vld [vmem:[#allocation5 + $0x2a8] sm:$0xff]
    %v219 = vld [vmem:[#allocation5 + $0x2b0] sm:$0xff]
    %v220 = vld [vmem:[#allocation5 + $0x2b8] sm:$0xff]
    %v221 = vld [vmem:[#allocation5 + $0x2c0] sm:$0xff]
    %v222 = vld [vmem:[#allocation5 + $0x2c8] sm:$0xff]
    %v223 = vld [vmem:[#allocation5 + $0x2d0] sm:$0xff]
    %v224 = vld [vmem:[#allocation5 + $0x2d8] sm:$0xff]
    %v225 = vld [vmem:[#allocation5 + $0x2e0] sm:$0xff]
    %v226 = vld [vmem:[#allocation5 + $0x2e8] sm:$0xff]
    %v227 = vld [vmem:[#allocation5 + $0x2f0] sm:$0xff]
    %v228 = vld [vmem:[#allocation5 + $0x2f8] sm:$0xff]
    %v229 = vld [vmem:[#allocation5 + $0x300] sm:$0xff]
    %v230 = vld [vmem:[#allocation5 + $0x308] sm:$0xff]
    %v231 = vld [vmem:[#allocation5 + $0x310] sm:$0xff]
    %v232 = vld [vmem:[#allocation5 + $0x318] sm:$0xff]
    %v233 = vld [vmem:[#allocation5 + $0x320] sm:$0xff]
    %v234 = vld [vmem:[#allocation5 + $0x328] sm:$0xff]
    %v235 = vld [vmem:[#allocation5 + $0x330] sm:$0xff]
    %v236 = vld [vmem:[#allocation5 + $0x338] sm:$0xff]
    %v237 = vld [vmem:[#allocation5 + $0x340] sm:$0xff]
    %v238 = vld [vmem:[#allocation5 + $0x348] sm:$0xff]
    %v239 = vld [vmem:[#allocation5 + $0x350] sm:$0xff]
    %v240 = vld [vmem:[#allocation5 + $0x358] sm:$0xff]
    %v241 = vld [vmem:[#allocation5 + $0x360] sm:$0xff]
    %v242 = vld [vmem:[#allocation5 + $0x368] sm:$0xff]
    %v243 = vld [vmem:[#allocation5 + $0x370] sm:$0xff]
    %v244 = vld [vmem:[#allocation5 + $0x378] sm:$0xff]
    %v245 = vld [vmem:[#allocation5 + $0x380] sm:$0xff]
    %v246 = vld [vmem:[#allocation5 + $0x388] sm:$0xff]
    %v247 = vld [vmem:[#allocation5 + $0x390] sm:$0xff]
    %v248 = vld [vmem:[#allocation5 + $0x398] sm:$0xff]
    %v249 = vld [vmem:[#allocation5 + $0x3a0] sm:$0xff]
    %v250 = vld [vmem:[#allocation5 + $0x3a8] sm:$0xff]
    %v251 = vld [vmem:[#allocation5 + $0x3b0] sm:$0xff]
    %v252 = vld [vmem:[#allocation5 + $0x3b8] sm:$0xff]
    %v253 = vld [vmem:[#allocation5 + $0x3c0] sm:$0xff]
    %v254 = vld [vmem:[#allocation5 + $0x3c8] sm:$0xff]
    %v255 = vld [vmem:[#allocation5 + $0x3d0] sm:$0xff]
    %v256 = vld [vmem:[#allocation5 + $0x3d8] sm:$0xff]
    %v257 = vld [vmem:[#allocation5 + $0x3e0] sm:$0xff]
    %v258 = vld [vmem:[#allocation5 + $0x3e8] sm:$0xff]
    %v259 = vld [vmem:[#allocation5 + $0x3f0] sm:$0xff]
    %v260 = vld [vmem:[#allocation5 + $0x3f8] sm:$0xff]
    %v261 = vld [vmem:[#allocation5 + $0x400] sm:$0xff]
    %v262 = vld [vmem:[#allocation5 + $0x408] sm:$0xff]
    %v263 = vld [vmem:[#allocation5 + $0x410] sm:$0xff]
    %v264 = vld [vmem:[#allocation5 + $0x418] sm:$0xff]
    %v265 = vld [vmem:[#allocation5 + $0x420] sm:$0xff]
    %v266 = vld [vmem:[#allocation5 + $0x428] sm:$0xff]
    %v267 = vld [vmem:[#allocation5 + $0x430] sm:$0xff]
    %v268 = vld [vmem:[#allocation5 + $0x438] sm:$0xff]
    %v269 = vld [vmem:[#allocation5 + $0x440] sm:$0xff]
    %v270 = vld [vmem:[#allocation5 + $0x448] sm:$0xff]
    %v271 = vld [vmem:[#allocation5 + $0x450] sm:$0xff]
    %v272 = vld [vmem:[#allocation5 + $0x458] sm:$0xff]
    %v273 = vld [vmem:[#allocation5 + $0x460] sm:$0xff]
    %v274 = vld [vmem:[#allocation5 + $0x468] sm:$0xff]
    %v275 = vld [vmem:[#allocation5 + $0x470] sm:$0xff]
    %v276 = vld [vmem:[#allocation5 + $0x478] sm:$0xff]
    %v277 = vld [vmem:[#allocation5 + $0x480] sm:$0xff]
    %v278 = vld [vmem:[#allocation5 + $0x488] sm:$0xff]
    %v279 = vld [vmem:[#allocation5 + $0x490] sm:$0xff]
    %v280 = vld [vmem:[#allocation5 + $0x498] sm:$0xff]
    %v281 = vld [vmem:[#allocation5 + $0x4a0] sm:$0xff]
    %v282 = vld [vmem:[#allocation5 + $0x4a8] sm:$0xff]
    %v283 = vld [vmem:[#allocation5 + $0x4b0] sm:$0xff]
    %v284 = vld [vmem:[#allocation5 + $0x4b8] sm:$0xff]
    %v285 = vld [vmem:[#allocation5 + $0x4c0] sm:$0xff]
    %v286 = vld [vmem:[#allocation5 + $0x4c8] sm:$0xff]
    %v287 = vld [vmem:[#allocation5 + $0x4d0] sm:$0xff]
    %v288 = vld [vmem:[#allocation5 + $0x4d8] sm:$0xff]
    %v289 = vld [vmem:[#allocation5 + $0x4e0] sm:$0xff]
    %v290 = vld [vmem:[#allocation5 + $0x4e8] sm:$0xff]
    %v291 = vld [vmem:[#allocation5 + $0x4f0] sm:$0xff]
    %v292 = vld [vmem:[#allocation5 + $0x4f8] sm:$0xff]
    %v293 = vld [vmem:[#allocation5 + $0x500] sm:$0xff]
    %v294 = vld [vmem:[#allocation5 + $0x508] sm:$0xff]
    %v295 = vld [vmem:[#allocation5 + $0x510] sm:$0xff]
    %v296 = vld [vmem:[#allocation5 + $0x518] sm:$0xff]
    %v297 = vld [vmem:[#allocation5 + $0x520] sm:$0xff]
    %v298 = vld [vmem:[#allocation5 + $0x528] sm:$0xff]
    %v299 = vld [vmem:[#allocation5 + $0x530] sm:$0xff]
    %v300 = vld [vmem:[#allocation5 + $0x538] sm:$0xff]
    %v301 = vld [vmem:[#allocation5 + $0x540] sm:$0xff]
    %v302 = vld [vmem:[#allocation5 + $0x548] sm:$0xff]
    %v303 = vld [vmem:[#allocation5 + $0x550] sm:$0xff]
    %v304 = vld [vmem:[#allocation5 + $0x558] sm:$0xff]
    %v305 = vld [vmem:[#allocation5 + $0x560] sm:$0xff]
    %v306 = vld [vmem:[#allocation5 + $0x568] sm:$0xff]
    %v307 = vld [vmem:[#allocation5 + $0x570] sm:$0xff]
    %v308 = vld [vmem:[#allocation5 + $0x578] sm:$0xff]
    %v309 = vld [vmem:[#allocation5 + $0x580] sm:$0xff]
    %v310 = vld [vmem:[#allocation5 + $0x588] sm:$0xff]
    %v311 = vld [vmem:[#allocation5 + $0x590] sm:$0xff]
    %v312 = vld [vmem:[#allocation5 + $0x598] sm:$0xff]
    %v313 = vld [vmem:[#allocation5 + $0x5a0] sm:$0xff]
    %v314 = vld [vmem:[#allocation5 + $0x5a8] sm:$0xff]
    %v315 = vld [vmem:[#allocation5 + $0x5b0] sm:$0xff]
    %v316 = vld [vmem:[#allocation5 + $0x5b8] sm:$0xff]
    %v317 = vld [vmem:[#allocation5 + $0x5c0] sm:$0xff]
    %v318 = vld [vmem:[#allocation5 + $0x5c8] sm:$0xff]
    %v319 = vld [vmem:[#allocation5 + $0x5d0] sm:$0xff]
    %v320 = vld [vmem:[#allocation5 + $0x5d8] sm:$0xff]
    %v321 = vld [vmem:[#allocation5 + $0x5e0] sm:$0xff]
    %v322 = vld [vmem:[#allocation5 + $0x5e8] sm:$0xff]
    %v323 = vld [vmem:[#allocation5 + $0x5f0] sm:$0xff]
    %v324 = vld [vmem:[#allocation5 + $0x5f8] sm:$0xff]
    %v325 = vld [vmem:[#allocation5 + $0x600] sm:$0xff]
    %v326 = vld [vmem:[#allocation5 + $0x608] sm:$0xff]
    %v327 = vld [vmem:[#allocation5 + $0x610] sm:$0xff]
    %v328 = vld [vmem:[#allocation5 + $0x618] sm:$0xff]
    %v329 = vld [vmem:[#allocation5 + $0x620] sm:$0xff]
    %v330 = vld [vmem:[#allocation5 + $0x628] sm:$0xff]
    %v331 = vld [vmem:[#allocation5 + $0x630] sm:$0xff]
    %v332 = vld [vmem:[#allocation5 + $0x638] sm:$0xff]
    %v333 = vld [vmem:[#allocation5 + $0x640] sm:$0xff]
    %v334 = vld [vmem:[#allocation5 + $0x648] sm:$0xff]
    %v335 = vld [vmem:[#allocation5 + $0x650] sm:$0xff]
    %v336 = vld [vmem:[#allocation5 + $0x658] sm:$0xff]
    %v337 = vld [vmem:[#allocation5 + $0x660] sm:$0xff]
    %v338 = vld [vmem:[#allocation5 + $0x668] sm:$0xff]
    %v339 = vld [vmem:[#allocation5 + $0x670] sm:$0xff]
    %v340 = vld [vmem:[#allocation5 + $0x678] sm:$0xff]
    %v341 = vld [vmem:[#allocation5 + $0x680] sm:$0xff]
    %v342 = vld [vmem:[#allocation5 + $0x688] sm:$0xff]
    %v343 = vld [vmem:[#allocation5 + $0x690] sm:$0xff]
    %v344 = vld [vmem:[#allocation5 + $0x698] sm:$0xff]
    %v345 = vld [vmem:[#allocation5 + $0x6a0] sm:$0xff]
    %v346 = vld [vmem:[#allocation5 + $0x6a8] sm:$0xff]
    %v347 = vld [vmem:[#allocation5 + $0x6b0] sm:$0xff]
    %v348 = vld [vmem:[#allocation5 + $0x6b8] sm:$0xff]
    %v349 = vld [vmem:[#allocation5 + $0x6c0] sm:$0xff]
    %v350 = vld [vmem:[#allocation5 + $0x6c8] sm:$0xff]
    %v351 = vld [vmem:[#allocation5 + $0x6d0] sm:$0xff]
    %v352 = vld [vmem:[#allocation5 + $0x6d8] sm:$0xff]
    %v353 = vld [vmem:[#allocation5 + $0x6e0] sm:$0xff]
    %v354 = vld [vmem:[#allocation5 + $0x6e8] sm:$0xff]
    %v355 = vld [vmem:[#allocation5 + $0x6f0] sm:$0xff]
    %v356 = vld [vmem:[#allocation5 + $0x6f8] sm:$0xff]
    %v357 = vld [vmem:[#allocation5 + $0x700] sm:$0xff]
    %v358 = vld [vmem:[#allocation5 + $0x708] sm:$0xff]
    %v359 = vld [vmem:[#allocation5 + $0x710] sm:$0xff]
    %v360 = vld [vmem:[#allocation5 + $0x718] sm:$0xff]
    %v361 = vld [vmem:[#allocation5 + $0x720] sm:$0xff]
    %v362 = vld [vmem:[#allocation5 + $0x728] sm:$0xff]
    %v363 = vld [vmem:[#allocation5 + $0x730] sm:$0xff]
    %v364 = vld [vmem:[#allocation5 + $0x738] sm:$0xff]
    %v365 = vld [vmem:[#allocation5 + $0x740] sm:$0xff]
    %v366 = vld [vmem:[#allocation5 + $0x748] sm:$0xff]
    %v367 = vld [vmem:[#allocation5 + $0x750] sm:$0xff]
    %v368 = vld [vmem:[#allocation5 + $0x758] sm:$0xff]
    %v369 = vld [vmem:[#allocation5 + $0x760] sm:$0xff]
    %v370 = vld [vmem:[#allocation5 + $0x768] sm:$0xff]
    %v371 = vld [vmem:[#allocation5 + $0x770] sm:$0xff]
    %v372 = vld [vmem:[#allocation5 + $0x778] sm:$0xff]
    %v373 = vld [vmem:[#allocation5 + $0x780] sm:$0xff]
    %v374 = vld [vmem:[#allocation5 + $0x788] sm:$0xff]
    %v375 = vld [vmem:[#allocation5 + $0x790] sm:$0xff]
    %v376 = vld [vmem:[#allocation5 + $0x798] sm:$0xff]
    %v377 = vld [vmem:[#allocation5 + $0x7a0] sm:$0xff]
    %v378 = vld [vmem:[#allocation5 + $0x7a8] sm:$0xff]
    %v379 = vld [vmem:[#allocation5 + $0x7b0] sm:$0xff]
    %v380 = vld [vmem:[#allocation5 + $0x7b8] sm:$0xff]
    %v381 = vld [vmem:[#allocation5 + $0x7c0] sm:$0xff]
    %v382 = vld [vmem:[#allocation5 + $0x7c8] sm:$0xff]
    %v383 = vld [vmem:[#allocation5 + $0x7d0] sm:$0xff]
    %v384 = vld [vmem:[#allocation5 + $0x7d8] sm:$0xff]
    %v385 = vld [vmem:[#allocation5 + $0x7e0] sm:$0xff]
    %v386 = vld [vmem:[#allocation5 + $0x7e8] sm:$0xff]
    %v387 = vld [vmem:[#allocation5 + $0x7f0] sm:$0xff]
    %v388 = vld [vmem:[#allocation5 + $0x7f8] sm:$0xff]
    %v645 = vunpack.c.l.b16 %v133
    %v646 = vunpack.c.h.b16 %v133
    %v647 = vunpack.c.l.b16 %v134
    %v648 = vunpack.c.h.b16 %v134
    %v649 = vunpack.c.l.b16 %v135
    %v650 = vunpack.c.h.b16 %v135
    %v651 = vunpack.c.l.b16 %v136
    %v652 = vunpack.c.h.b16 %v136
    %v653 = vunpack.c.l.b16 %v137
    %v654 = vunpack.c.h.b16 %v137
    %v655 = vunpack.c.l.b16 %v138
    %v656 = vunpack.c.h.b16 %v138
    %v657 = vunpack.c.l.b16 %v139
    %v658 = vunpack.c.h.b16 %v139
    %v659 = vunpack.c.l.b16 %v140
    %v660 = vunpack.c.h.b16 %v140
    %v661 = vunpack.c.l.b16 %v141
    %v662 = vunpack.c.h.b16 %v141
    %v663 = vunpack.c.l.b16 %v142
    %v664 = vunpack.c.h.b16 %v142
    %v665 = vunpack.c.l.b16 %v143
    %v666 = vunpack.c.h.b16 %v143
    %v667 = vunpack.c.l.b16 %v144
    %v668 = vunpack.c.h.b16 %v144
    %v669 = vunpack.c.l.b16 %v145
    %v670 = vunpack.c.h.b16 %v145
    %v671 = vunpack.c.l.b16 %v146
    %v672 = vunpack.c.h.b16 %v146
    %v673 = vunpack.c.l.b16 %v147
    %v674 = vunpack.c.h.b16 %v147
    %v675 = vunpack.c.l.b16 %v148
    %v676 = vunpack.c.h.b16 %v148
    %v677 = vunpack.c.l.b16 %v149
    %v678 = vunpack.c.h.b16 %v149
    %v679 = vunpack.c.l.b16 %v150
    %v680 = vunpack.c.h.b16 %v150
    %v681 = vunpack.c.l.b16 %v151
    %v682 = vunpack.c.h.b16 %v151
    %v683 = vunpack.c.l.b16 %v152
    %v684 = vunpack.c.h.b16 %v152
    %v685 = vunpack.c.l.b16 %v153
    %v686 = vunpack.c.h.b16 %v153
    %v687 = vunpack.c.l.b16 %v154
    %v688 = vunpack.c.h.b16 %v154
    %v689 = vunpack.c.l.b16 %v155
    %v690 = vunpack.c.h.b16 %v155
    %v691 = vunpack.c.l.b16 %v156
    %v692 = vunpack.c.h.b16 %v156
    %v693 = vunpack.c.l.b16 %v157
    %v694 = vunpack.c.h.b16 %v157
    %v695 = vunpack.c.l.b16 %v158
    %v696 = vunpack.c.h.b16 %v158
    %v697 = vunpack.c.l.b16 %v159
    %v698 = vunpack.c.h.b16 %v159
    %v699 = vunpack.c.l.b16 %v160
    %v700 = vunpack.c.h.b16 %v160
    %v701 = vunpack.c.l.b16 %v161
    %v702 = vunpack.c.h.b16 %v161
    %v703 = vunpack.c.l.b16 %v162
    %v704 = vunpack.c.h.b16 %v162
    %v705 = vunpack.c.l.b16 %v163
    %v706 = vunpack.c.h.b16 %v163
    %v707 = vunpack.c.l.b16 %v164
    %v708 = vunpack.c.h.b16 %v164
    %v709 = vunpack.c.l.b16 %v165
    %v710 = vunpack.c.h.b16 %v165
    %v711 = vunpack.c.l.b16 %v166
    %v712 = vunpack.c.h.b16 %v166
    %v713 = vunpack.c.l.b16 %v167
    %v714 = vunpack.c.h.b16 %v167
    %v715 = vunpack.c.l.b16 %v168
    %v716 = vunpack.c.h.b16 %v168
    %v717 = vunpack.c.l.b16 %v169
    %v718 = vunpack.c.h.b16 %v169
    %v719 = vunpack.c.l.b16 %v170
    %v720 = vunpack.c.h.b16 %v170
    %v721 = vunpack.c.l.b16 %v171
    %v722 = vunpack.c.h.b16 %v171
    %v723 = vunpack.c.l.b16 %v172
    %v724 = vunpack.c.h.b16 %v172
    %v725 = vunpack.c.l.b16 %v173
    %v726 = vunpack.c.h.b16 %v173
    %v727 = vunpack.c.l.b16 %v174
    %v728 = vunpack.c.h.b16 %v174
    %v729 = vunpack.c.l.b16 %v175
    %v730 = vunpack.c.h.b16 %v175
    %v731 = vunpack.c.l.b16 %v176
    %v732 = vunpack.c.h.b16 %v176
    %v733 = vunpack.c.l.b16 %v177
    %v734 = vunpack.c.h.b16 %v177
    %v735 = vunpack.c.l.b16 %v178
    %v736 = vunpack.c.h.b16 %v178
    %v737 = vunpack.c.l.b16 %v179
    %v738 = vunpack.c.h.b16 %v179
    %v739 = vunpack.c.l.b16 %v180
    %v740 = vunpack.c.h.b16 %v180
    %v741 = vunpack.c.l.b16 %v181
    %v742 = vunpack.c.h.b16 %v181
    %v743 = vunpack.c.l.b16 %v182
    %v744 = vunpack.c.h.b16 %v182
    %v745 = vunpack.c.l.b16 %v183
    %v746 = vunpack.c.h.b16 %v183
    %v747 = vunpack.c.l.b16 %v184
    %v748 = vunpack.c.h.b16 %v184
    %v749 = vunpack.c.l.b16 %v185
    %v750 = vunpack.c.h.b16 %v185
    %v751 = vunpack.c.l.b16 %v186
    %v752 = vunpack.c.h.b16 %v186
    %v753 = vunpack.c.l.b16 %v187
    %v754 = vunpack.c.h.b16 %v187
    %v755 = vunpack.c.l.b16 %v188
    %v756 = vunpack.c.h.b16 %v188
    %v757 = vunpack.c.l.b16 %v189
    %v758 = vunpack.c.h.b16 %v189
    %v759 = vunpack.c.l.b16 %v190
    %v760 = vunpack.c.h.b16 %v190
    %v761 = vunpack.c.l.b16 %v191
    %v762 = vunpack.c.h.b16 %v191
    %v763 = vunpack.c.l.b16 %v192
    %v764 = vunpack.c.h.b16 %v192
    %v765 = vunpack.c.l.b16 %v193
    %v766 = vunpack.c.h.b16 %v193
    %v767 = vunpack.c.l.b16 %v194
    %v768 = vunpack.c.h.b16 %v194
    %v769 = vunpack.c.l.b16 %v195
    %v770 = vunpack.c.h.b16 %v195
    %v771 = vunpack.c.l.b16 %v196
    %v772 = vunpack.c.h.b16 %v196
    %v773 = vunpack.c.l.b16 %v197
    %v774 = vunpack.c.h.b16 %v197
    %v775 = vunpack.c.l.b16 %v198
    %v776 = vunpack.c.h.b16 %v198
    %v777 = vunpack.c.l.b16 %v199
    %v778 = vunpack.c.h.b16 %v199
    %v779 = vunpack.c.l.b16 %v200
    %v780 = vunpack.c.h.b16 %v200
    %v781 = vunpack.c.l.b16 %v201
    %v782 = vunpack.c.h.b16 %v201
    %v783 = vunpack.c.l.b16 %v202
    %v784 = vunpack.c.h.b16 %v202
    %v785 = vunpack.c.l.b16 %v203
    %v786 = vunpack.c.h.b16 %v203
    %v787 = vunpack.c.l.b16 %v204
    %v788 = vunpack.c.h.b16 %v204
    %v789 = vunpack.c.l.b16 %v205
    %v790 = vunpack.c.h.b16 %v205
    %v791 = vunpack.c.l.b16 %v206
    %v792 = vunpack.c.h.b16 %v206
    %v793 = vunpack.c.l.b16 %v207
    %v794 = vunpack.c.h.b16 %v207
    %v795 = vunpack.c.l.b16 %v208
    %v796 = vunpack.c.h.b16 %v208
    %v797 = vunpack.c.l.b16 %v209
    %v798 = vunpack.c.h.b16 %v209
    %v799 = vunpack.c.l.b16 %v210
    %v800 = vunpack.c.h.b16 %v210
    %v801 = vunpack.c.l.b16 %v211
    %v802 = vunpack.c.h.b16 %v211
    %v803 = vunpack.c.l.b16 %v212
    %v804 = vunpack.c.h.b16 %v212
    %v805 = vunpack.c.l.b16 %v213
    %v806 = vunpack.c.h.b16 %v213
    %v807 = vunpack.c.l.b16 %v214
    %v808 = vunpack.c.h.b16 %v214
    %v809 = vunpack.c.l.b16 %v215
    %v810 = vunpack.c.h.b16 %v215
    %v811 = vunpack.c.l.b16 %v216
    %v812 = vunpack.c.h.b16 %v216
    %v813 = vunpack.c.l.b16 %v217
    %v814 = vunpack.c.h.b16 %v217
    %v815 = vunpack.c.l.b16 %v218
    %v816 = vunpack.c.h.b16 %v218
    %v817 = vunpack.c.l.b16 %v219
    %v818 = vunpack.c.h.b16 %v219
    %v819 = vunpack.c.l.b16 %v220
    %v820 = vunpack.c.h.b16 %v220
    %v821 = vunpack.c.l.b16 %v221
    %v822 = vunpack.c.h.b16 %v221
    %v823 = vunpack.c.l.b16 %v222
    %v824 = vunpack.c.h.b16 %v222
    %v825 = vunpack.c.l.b16 %v223
    %v826 = vunpack.c.h.b16 %v223
    %v827 = vunpack.c.l.b16 %v224
    %v828 = vunpack.c.h.b16 %v224
    %v829 = vunpack.c.l.b16 %v225
    %v830 = vunpack.c.h.b16 %v225
    %v831 = vunpack.c.l.b16 %v226
    %v832 = vunpack.c.h.b16 %v226
    %v833 = vunpack.c.l.b16 %v227
    %v834 = vunpack.c.h.b16 %v227
    %v835 = vunpack.c.l.b16 %v228
    %v836 = vunpack.c.h.b16 %v228
    %v837 = vunpack.c.l.b16 %v229
    %v838 = vunpack.c.h.b16 %v229
    %v839 = vunpack.c.l.b16 %v230
    %v840 = vunpack.c.h.b16 %v230
    %v841 = vunpack.c.l.b16 %v231
    %v842 = vunpack.c.h.b16 %v231
    %v843 = vunpack.c.l.b16 %v232
    %v844 = vunpack.c.h.b16 %v232
    %v845 = vunpack.c.l.b16 %v233
    %v846 = vunpack.c.h.b16 %v233
    %v847 = vunpack.c.l.b16 %v234
    %v848 = vunpack.c.h.b16 %v234
    %v849 = vunpack.c.l.b16 %v235
    %v850 = vunpack.c.h.b16 %v235
    %v851 = vunpack.c.l.b16 %v236
    %v852 = vunpack.c.h.b16 %v236
    %v853 = vunpack.c.l.b16 %v237
    %v854 = vunpack.c.h.b16 %v237
    %v855 = vunpack.c.l.b16 %v238
    %v856 = vunpack.c.h.b16 %v238
    %v857 = vunpack.c.l.b16 %v239
    %v858 = vunpack.c.h.b16 %v239
    %v859 = vunpack.c.l.b16 %v240
    %v860 = vunpack.c.h.b16 %v240
    %v861 = vunpack.c.l.b16 %v241
    %v862 = vunpack.c.h.b16 %v241
    %v863 = vunpack.c.l.b16 %v242
    %v864 = vunpack.c.h.b16 %v242
    %v865 = vunpack.c.l.b16 %v243
    %v866 = vunpack.c.h.b16 %v243
    %v867 = vunpack.c.l.b16 %v244
    %v868 = vunpack.c.h.b16 %v244
    %v869 = vunpack.c.l.b16 %v245
    %v870 = vunpack.c.h.b16 %v245
    %v871 = vunpack.c.l.b16 %v246
    %v872 = vunpack.c.h.b16 %v246
    %v873 = vunpack.c.l.b16 %v247
    %v874 = vunpack.c.h.b16 %v247
    %v875 = vunpack.c.l.b16 %v248
    %v876 = vunpack.c.h.b16 %v248
    %v877 = vunpack.c.l.b16 %v249
    %v878 = vunpack.c.h.b16 %v249
    %v879 = vunpack.c.l.b16 %v250
    %v880 = vunpack.c.h.b16 %v250
    %v881 = vunpack.c.l.b16 %v251
    %v882 = vunpack.c.h.b16 %v251
    %v883 = vunpack.c.l.b16 %v252
    %v884 = vunpack.c.h.b16 %v252
    %v885 = vunpack.c.l.b16 %v253
    %v886 = vunpack.c.h.b16 %v253
    %v887 = vunpack.c.l.b16 %v254
    %v888 = vunpack.c.h.b16 %v254
    %v889 = vunpack.c.l.b16 %v255
    %v890 = vunpack.c.h.b16 %v255
    %v891 = vunpack.c.l.b16 %v256
    %v892 = vunpack.c.h.b16 %v256
    %v893 = vunpack.c.l.b16 %v257
    %v894 = vunpack.c.h.b16 %v257
    %v895 = vunpack.c.l.b16 %v258
    %v896 = vunpack.c.h.b16 %v258
    %v897 = vunpack.c.l.b16 %v259
    %v898 = vunpack.c.h.b16 %v259
    %v899 = vunpack.c.l.b16 %v260
    %v900 = vunpack.c.h.b16 %v260
    %v901 = vunpack.c.l.b16 %v261
    %v902 = vunpack.c.h.b16 %v261
    %v903 = vunpack.c.l.b16 %v262
    %v904 = vunpack.c.h.b16 %v262
    %v905 = vunpack.c.l.b16 %v263
    %v906 = vunpack.c.h.b16 %v263
    %v907 = vunpack.c.l.b16 %v264
    %v908 = vunpack.c.h.b16 %v264
    %v909 = vunpack.c.l.b16 %v265
    %v910 = vunpack.c.h.b16 %v265
    %v911 = vunpack.c.l.b16 %v266
    %v912 = vunpack.c.h.b16 %v266
    %v913 = vunpack.c.l.b16 %v267
    %v914 = vunpack.c.h.b16 %v267
    %v915 = vunpack.c.l.b16 %v268
    %v916 = vunpack.c.h.b16 %v268
    %v917 = vunpack.c.l.b16 %v269
    %v918 = vunpack.c.h.b16 %v269
    %v919 = vunpack.c.l.b16 %v270
    %v920 = vunpack.c.h.b16 %v270
    %v921 = vunpack.c.l.b16 %v271
    %v922 = vunpack.c.h.b16 %v271
    %v923 = vunpack.c.l.b16 %v272
    %v924 = vunpack.c.h.b16 %v272
    %v925 = vunpack.c.l.b16 %v273
    %v926 = vunpack.c.h.b16 %v273
    %v927 = vunpack.c.l.b16 %v274
    %v928 = vunpack.c.h.b16 %v274
    %v929 = vunpack.c.l.b16 %v275
    %v930 = vunpack.c.h.b16 %v275
    %v931 = vunpack.c.l.b16 %v276
    %v932 = vunpack.c.h.b16 %v276
    %v933 = vunpack.c.l.b16 %v277
    %v934 = vunpack.c.h.b16 %v277
    %v935 = vunpack.c.l.b16 %v278
    %v936 = vunpack.c.h.b16 %v278
    %v937 = vunpack.c.l.b16 %v279
    %v938 = vunpack.c.h.b16 %v279
    %v939 = vunpack.c.l.b16 %v280
    %v940 = vunpack.c.h.b16 %v280
    %v941 = vunpack.c.l.b16 %v281
    %v942 = vunpack.c.h.b16 %v281
    %v943 = vunpack.c.l.b16 %v282
    %v944 = vunpack.c.h.b16 %v282
    %v945 = vunpack.c.l.b16 %v283
    %v946 = vunpack.c.h.b16 %v283
    %v947 = vunpack.c.l.b16 %v284
    %v948 = vunpack.c.h.b16 %v284
    %v949 = vunpack.c.l.b16 %v285
    %v950 = vunpack.c.h.b16 %v285
    %v951 = vunpack.c.l.b16 %v286
    %v952 = vunpack.c.h.b16 %v286
    %v953 = vunpack.c.l.b16 %v287
    %v954 = vunpack.c.h.b16 %v287
    %v955 = vunpack.c.l.b16 %v288
    %v956 = vunpack.c.h.b16 %v288
    %v957 = vunpack.c.l.b16 %v289
    %v958 = vunpack.c.h.b16 %v289
    %v959 = vunpack.c.l.b16 %v290
    %v960 = vunpack.c.h.b16 %v290
    %v961 = vunpack.c.l.b16 %v291
    %v962 = vunpack.c.h.b16 %v291
    %v963 = vunpack.c.l.b16 %v292
    %v964 = vunpack.c.h.b16 %v292
    %v965 = vunpack.c.l.b16 %v293
    %v966 = vunpack.c.h.b16 %v293
    %v967 = vunpack.c.l.b16 %v294
    %v968 = vunpack.c.h.b16 %v294
    %v969 = vunpack.c.l.b16 %v295
    %v970 = vunpack.c.h.b16 %v295
    %v971 = vunpack.c.l.b16 %v296
    %v972 = vunpack.c.h.b16 %v296
    %v973 = vunpack.c.l.b16 %v297
    %v974 = vunpack.c.h.b16 %v297
    %v975 = vunpack.c.l.b16 %v298
    %v976 = vunpack.c.h.b16 %v298
    %v977 = vunpack.c.l.b16 %v299
    %v978 = vunpack.c.h.b16 %v299
    %v979 = vunpack.c.l.b16 %v300
    %v980 = vunpack.c.h.b16 %v300
    %v981 = vunpack.c.l.b16 %v301
    %v982 = vunpack.c.h.b16 %v301
    %v983 = vunpack.c.l.b16 %v302
    %v984 = vunpack.c.h.b16 %v302
    %v985 = vunpack.c.l.b16 %v303
    %v986 = vunpack.c.h.b16 %v303
    %v987 = vunpack.c.l.b16 %v304
    %v988 = vunpack.c.h.b16 %v304
    %v989 = vunpack.c.l.b16 %v305
    %v990 = vunpack.c.h.b16 %v305
    %v991 = vunpack.c.l.b16 %v306
    %v992 = vunpack.c.h.b16 %v306
    %v993 = vunpack.c.l.b16 %v307
    %v994 = vunpack.c.h.b16 %v307
    %v995 = vunpack.c.l.b16 %v308
    %v996 = vunpack.c.h.b16 %v308
    %v997 = vunpack.c.l.b16 %v309
    %v998 = vunpack.c.h.b16 %v309
    %v999 = vunpack.c.l.b16 %v310
    %v1000 = vunpack.c.h.b16 %v310
    %v1001 = vunpack.c.l.b16 %v311
    %v1002 = vunpack.c.h.b16 %v311
    %v1003 = vunpack.c.l.b16 %v312
    %v1004 = vunpack.c.h.b16 %v312
    %v1005 = vunpack.c.l.b16 %v313
    %v1006 = vunpack.c.h.b16 %v313
    %v1007 = vunpack.c.l.b16 %v314
    %v1008 = vunpack.c.h.b16 %v314
    %v1009 = vunpack.c.l.b16 %v315
    %v1010 = vunpack.c.h.b16 %v315
    %v1011 = vunpack.c.l.b16 %v316
    %v1012 = vunpack.c.h.b16 %v316
    %v1013 = vunpack.c.l.b16 %v317
    %v1014 = vunpack.c.h.b16 %v317
    %v1015 = vunpack.c.l.b16 %v318
    %v1016 = vunpack.c.h.b16 %v318
    %v1017 = vunpack.c.l.b16 %v319
    %v1018 = vunpack.c.h.b16 %v319
    %v1019 = vunpack.c.l.b16 %v320
    %v1020 = vunpack.c.h.b16 %v320
    %v1021 = vunpack.c.l.b16 %v321
    %v1022 = vunpack.c.h.b16 %v321
    %v1023 = vunpack.c.l.b16 %v322
    %v1024 = vunpack.c.h.b16 %v322
    %v1025 = vunpack.c.l.b16 %v323
    %v1026 = vunpack.c.h.b16 %v323
    %v1027 = vunpack.c.l.b16 %v324
    %v1028 = vunpack.c.h.b16 %v324
    %v1029 = vunpack.c.l.b16 %v325
    %v1030 = vunpack.c.h.b16 %v325
    %v1031 = vunpack.c.l.b16 %v326
    %v1032 = vunpack.c.h.b16 %v326
    %v1033 = vunpack.c.l.b16 %v327
    %v1034 = vunpack.c.h.b16 %v327
    %v1035 = vunpack.c.l.b16 %v328
    %v1036 = vunpack.c.h.b16 %v328
    %v1037 = vunpack.c.l.b16 %v329
    %v1038 = vunpack.c.h.b16 %v329
    %v1039 = vunpack.c.l.b16 %v330
    %v1040 = vunpack.c.h.b16 %v330
    %v1041 = vunpack.c.l.b16 %v331
    %v1042 = vunpack.c.h.b16 %v331
    %v1043 = vunpack.c.l.b16 %v332
    %v1044 = vunpack.c.h.b16 %v332
    %v1045 = vunpack.c.l.b16 %v333
    %v1046 = vunpack.c.h.b16 %v333
    %v1047 = vunpack.c.l.b16 %v334
    %v1048 = vunpack.c.h.b16 %v334
    %v1049 = vunpack.c.l.b16 %v335
    %v1050 = vunpack.c.h.b16 %v335
    %v1051 = vunpack.c.l.b16 %v336
    %v1052 = vunpack.c.h.b16 %v336
    %v1053 = vunpack.c.l.b16 %v337
    %v1054 = vunpack.c.h.b16 %v337
    %v1055 = vunpack.c.l.b16 %v338
    %v1056 = vunpack.c.h.b16 %v338
    %v1057 = vunpack.c.l.b16 %v339
    %v1058 = vunpack.c.h.b16 %v339
    %v1059 = vunpack.c.l.b16 %v340
    %v1060 = vunpack.c.h.b16 %v340
    %v1061 = vunpack.c.l.b16 %v341
    %v1062 = vunpack.c.h.b16 %v341
    %v1063 = vunpack.c.l.b16 %v342
    %v1064 = vunpack.c.h.b16 %v342
    %v1065 = vunpack.c.l.b16 %v343
    %v1066 = vunpack.c.h.b16 %v343
    %v1067 = vunpack.c.l.b16 %v344
    %v1068 = vunpack.c.h.b16 %v344
    %v1069 = vunpack.c.l.b16 %v345
    %v1070 = vunpack.c.h.b16 %v345
    %v1071 = vunpack.c.l.b16 %v346
    %v1072 = vunpack.c.h.b16 %v346
    %v1073 = vunpack.c.l.b16 %v347
    %v1074 = vunpack.c.h.b16 %v347
    %v1075 = vunpack.c.l.b16 %v348
    %v1076 = vunpack.c.h.b16 %v348
    %v1077 = vunpack.c.l.b16 %v349
    %v1078 = vunpack.c.h.b16 %v349
    %v1079 = vunpack.c.l.b16 %v350
    %v1080 = vunpack.c.h.b16 %v350
    %v1081 = vunpack.c.l.b16 %v351
    %v1082 = vunpack.c.h.b16 %v351
    %v1083 = vunpack.c.l.b16 %v352
    %v1084 = vunpack.c.h.b16 %v352
    %v1085 = vunpack.c.l.b16 %v353
    %v1086 = vunpack.c.h.b16 %v353
    %v1087 = vunpack.c.l.b16 %v354
    %v1088 = vunpack.c.h.b16 %v354
    %v1089 = vunpack.c.l.b16 %v355
    %v1090 = vunpack.c.h.b16 %v355
    %v1091 = vunpack.c.l.b16 %v356
    %v1092 = vunpack.c.h.b16 %v356
    %v1093 = vunpack.c.l.b16 %v357
    %v1094 = vunpack.c.h.b16 %v357
    %v1095 = vunpack.c.l.b16 %v358
    %v1096 = vunpack.c.h.b16 %v358
    %v1097 = vunpack.c.l.b16 %v359
    %v1098 = vunpack.c.h.b16 %v359
    %v1099 = vunpack.c.l.b16 %v360
    %v1100 = vunpack.c.h.b16 %v360
    %v1101 = vunpack.c.l.b16 %v361
    %v1102 = vunpack.c.h.b16 %v361
    %v1103 = vunpack.c.l.b16 %v362
    %v1104 = vunpack.c.h.b16 %v362
    %v1105 = vunpack.c.l.b16 %v363
    %v1106 = vunpack.c.h.b16 %v363
    %v1107 = vunpack.c.l.b16 %v364
    %v1108 = vunpack.c.h.b16 %v364
    %v1109 = vunpack.c.l.b16 %v365
    %v1110 = vunpack.c.h.b16 %v365
    %v1111 = vunpack.c.l.b16 %v366
    %v1112 = vunpack.c.h.b16 %v366
    %v1113 = vunpack.c.l.b16 %v367
    %v1114 = vunpack.c.h.b16 %v367
    %v1115 = vunpack.c.l.b16 %v368
    %v1116 = vunpack.c.h.b16 %v368
    %v1117 = vunpack.c.l.b16 %v369
    %v1118 = vunpack.c.h.b16 %v369
    %v1119 = vunpack.c.l.b16 %v370
    %v1120 = vunpack.c.h.b16 %v370
    %v1121 = vunpack.c.l.b16 %v371
    %v1122 = vunpack.c.h.b16 %v371
    %v1123 = vunpack.c.l.b16 %v372
    %v1124 = vunpack.c.h.b16 %v372
    %v1125 = vunpack.c.l.b16 %v373
    %v1126 = vunpack.c.h.b16 %v373
    %v1127 = vunpack.c.l.b16 %v374
    %v1128 = vunpack.c.h.b16 %v374
    %v1129 = vunpack.c.l.b16 %v375
    %v1130 = vunpack.c.h.b16 %v375
    %v1131 = vunpack.c.l.b16 %v376
    %v1132 = vunpack.c.h.b16 %v376
    %v1133 = vunpack.c.l.b16 %v377
    %v1134 = vunpack.c.h.b16 %v377
    %v1135 = vunpack.c.l.b16 %v378
    %v1136 = vunpack.c.h.b16 %v378
    %v1137 = vunpack.c.l.b16 %v379
    %v1138 = vunpack.c.h.b16 %v379
    %v1139 = vunpack.c.l.b16 %v380
    %v1140 = vunpack.c.h.b16 %v380
    %v1141 = vunpack.c.l.b16 %v381
    %v1142 = vunpack.c.h.b16 %v381
    %v1143 = vunpack.c.l.b16 %v382
    %v1144 = vunpack.c.h.b16 %v382
    %v1145 = vunpack.c.l.b16 %v383
    %v1146 = vunpack.c.h.b16 %v383
    %v1147 = vunpack.c.l.b16 %v384
    %v1148 = vunpack.c.h.b16 %v384
    %v1149 = vunpack.c.l.b16 %v385
    %v1150 = vunpack.c.h.b16 %v385
    %v1151 = vunpack.c.l.b16 %v386
    %v1152 = vunpack.c.h.b16 %v386
    %v1153 = vunpack.c.l.b16 %v387
    %v1154 = vunpack.c.h.b16 %v387
    %v1155 = vunpack.c.l.b16 %v388
    %v1156 = vunpack.c.h.b16 %v388
    %v1157 = vpack.c.b16 %v647, %v645
    %v1158 = vpack.c.b16 %v648, %v646
    %v1159 = vpack.c.b16 %v651, %v649
    %v1160 = vpack.c.b16 %v652, %v650
    %v1161 = vpack.c.b16 %v655, %v653
    %v1162 = vpack.c.b16 %v656, %v654
    %v1163 = vpack.c.b16 %v659, %v657
    %v1164 = vpack.c.b16 %v660, %v658
    %v1165 = vpack.c.b16 %v663, %v661
    %v1166 = vpack.c.b16 %v664, %v662
    %v1167 = vpack.c.b16 %v667, %v665
    %v1168 = vpack.c.b16 %v668, %v666
    %v1169 = vpack.c.b16 %v671, %v669
    %v1170 = vpack.c.b16 %v672, %v670
    %v1171 = vpack.c.b16 %v675, %v673
    %v1172 = vpack.c.b16 %v676, %v674
    %v1173 = vpack.c.b16 %v679, %v677
    %v1174 = vpack.c.b16 %v680, %v678
    %v1175 = vpack.c.b16 %v683, %v681
    %v1176 = vpack.c.b16 %v684, %v682
    %v1177 = vpack.c.b16 %v687, %v685
    %v1178 = vpack.c.b16 %v688, %v686
    %v1179 = vpack.c.b16 %v691, %v689
    %v1180 = vpack.c.b16 %v692, %v690
    %v1181 = vpack.c.b16 %v695, %v693
    %v1182 = vpack.c.b16 %v696, %v694
    %v1183 = vpack.c.b16 %v699, %v697
    %v1184 = vpack.c.b16 %v700, %v698
    %v1185 = vpack.c.b16 %v703, %v701
    %v1186 = vpack.c.b16 %v704, %v702
    %v1187 = vpack.c.b16 %v707, %v705
    %v1188 = vpack.c.b16 %v708, %v706
    %v1189 = vpack.c.b16 %v711, %v709
    %v1190 = vpack.c.b16 %v712, %v710
    %v1191 = vpack.c.b16 %v715, %v713
    %v1192 = vpack.c.b16 %v716, %v714
    %v1193 = vpack.c.b16 %v719, %v717
    %v1194 = vpack.c.b16 %v720, %v718
    %v1195 = vpack.c.b16 %v723, %v721
    %v1196 = vpack.c.b16 %v724, %v722
    %v1197 = vpack.c.b16 %v727, %v725
    %v1198 = vpack.c.b16 %v728, %v726
    %v1199 = vpack.c.b16 %v731, %v729
    %v1200 = vpack.c.b16 %v732, %v730
    %v1201 = vpack.c.b16 %v735, %v733
    %v1202 = vpack.c.b16 %v736, %v734
    %v1203 = vpack.c.b16 %v739, %v737
    %v1204 = vpack.c.b16 %v740, %v738
    %v1205 = vpack.c.b16 %v743, %v741
    %v1206 = vpack.c.b16 %v744, %v742
    %v1207 = vpack.c.b16 %v747, %v745
    %v1208 = vpack.c.b16 %v748, %v746
    %v1209 = vpack.c.b16 %v751, %v749
    %v1210 = vpack.c.b16 %v752, %v750
    %v1211 = vpack.c.b16 %v755, %v753
    %v1212 = vpack.c.b16 %v756, %v754
    %v1213 = vpack.c.b16 %v759, %v757
    %v1214 = vpack.c.b16 %v760, %v758
    %v1215 = vpack.c.b16 %v763, %v761
    %v1216 = vpack.c.b16 %v764, %v762
    %v1217 = vpack.c.b16 %v767, %v765
    %v1218 = vpack.c.b16 %v768, %v766
    %v1219 = vpack.c.b16 %v771, %v769
    %v1220 = vpack.c.b16 %v772, %v770
    %v1221 = vpack.c.b16 %v775, %v773
    %v1222 = vpack.c.b16 %v776, %v774
    %v1223 = vpack.c.b16 %v779, %v777
    %v1224 = vpack.c.b16 %v780, %v778
    %v1225 = vpack.c.b16 %v783, %v781
    %v1226 = vpack.c.b16 %v784, %v782
    %v1227 = vpack.c.b16 %v787, %v785
    %v1228 = vpack.c.b16 %v788, %v786
    %v1229 = vpack.c.b16 %v791, %v789
    %v1230 = vpack.c.b16 %v792, %v790
    %v1231 = vpack.c.b16 %v795, %v793
    %v1232 = vpack.c.b16 %v796, %v794
    %v1233 = vpack.c.b16 %v799, %v797
    %v1234 = vpack.c.b16 %v800, %v798
    %v1235 = vpack.c.b16 %v803, %v801
    %v1236 = vpack.c.b16 %v804, %v802
    %v1237 = vpack.c.b16 %v807, %v805
    %v1238 = vpack.c.b16 %v808, %v806
    %v1239 = vpack.c.b16 %v811, %v809
    %v1240 = vpack.c.b16 %v812, %v810
    %v1241 = vpack.c.b16 %v815, %v813
    %v1242 = vpack.c.b16 %v816, %v814
    %v1243 = vpack.c.b16 %v819, %v817
    %v1244 = vpack.c.b16 %v820, %v818
    %v1245 = vpack.c.b16 %v823, %v821
    %v1246 = vpack.c.b16 %v824, %v822
    %v1247 = vpack.c.b16 %v827, %v825
    %v1248 = vpack.c.b16 %v828, %v826
    %v1249 = vpack.c.b16 %v831, %v829
    %v1250 = vpack.c.b16 %v832, %v830
    %v1251 = vpack.c.b16 %v835, %v833
    %v1252 = vpack.c.b16 %v836, %v834
    %v1253 = vpack.c.b16 %v839, %v837
    %v1254 = vpack.c.b16 %v840, %v838
    %v1255 = vpack.c.b16 %v843, %v841
    %v1256 = vpack.c.b16 %v844, %v842
    %v1257 = vpack.c.b16 %v847, %v845
    %v1258 = vpack.c.b16 %v848, %v846
    %v1259 = vpack.c.b16 %v851, %v849
    %v1260 = vpack.c.b16 %v852, %v850
    %v1261 = vpack.c.b16 %v855, %v853
    %v1262 = vpack.c.b16 %v856, %v854
    %v1263 = vpack.c.b16 %v859, %v857
    %v1264 = vpack.c.b16 %v860, %v858
    %v1265 = vpack.c.b16 %v863, %v861
    %v1266 = vpack.c.b16 %v864, %v862
    %v1267 = vpack.c.b16 %v867, %v865
    %v1268 = vpack.c.b16 %v868, %v866
    %v1269 = vpack.c.b16 %v871, %v869
    %v1270 = vpack.c.b16 %v872, %v870
    %v1271 = vpack.c.b16 %v875, %v873
    %v1272 = vpack.c.b16 %v876, %v874
    %v1273 = vpack.c.b16 %v879, %v877
    %v1274 = vpack.c.b16 %v880, %v878
    %v1275 = vpack.c.b16 %v883, %v881
    %v1276 = vpack.c.b16 %v884, %v882
    %v1277 = vpack.c.b16 %v887, %v885
    %v1278 = vpack.c.b16 %v888, %v886
    %v1279 = vpack.c.b16 %v891, %v889
    %v1280 = vpack.c.b16 %v892, %v890
    %v1281 = vpack.c.b16 %v895, %v893
    %v1282 = vpack.c.b16 %v896, %v894
    %v1283 = vpack.c.b16 %v899, %v897
    %v1284 = vpack.c.b16 %v900, %v898
    %v1285 = vpack.c.b16 %v903, %v901
    %v1286 = vpack.c.b16 %v904, %v902
    %v1287 = vpack.c.b16 %v907, %v905
    %v1288 = vpack.c.b16 %v908, %v906
    %v1289 = vpack.c.b16 %v911, %v909
    %v1290 = vpack.c.b16 %v912, %v910
    %v1291 = vpack.c.b16 %v915, %v913
    %v1292 = vpack.c.b16 %v916, %v914
    %v1293 = vpack.c.b16 %v919, %v917
    %v1294 = vpack.c.b16 %v920, %v918
    %v1295 = vpack.c.b16 %v923, %v921
    %v1296 = vpack.c.b16 %v924, %v922
    %v1297 = vpack.c.b16 %v927, %v925
    %v1298 = vpack.c.b16 %v928, %v926
    %v1299 = vpack.c.b16 %v931, %v929
    %v1300 = vpack.c.b16 %v932, %v930
    %v1301 = vpack.c.b16 %v935, %v933
    %v1302 = vpack.c.b16 %v936, %v934
    %v1303 = vpack.c.b16 %v939, %v937
    %v1304 = vpack.c.b16 %v940, %v938
    %v1305 = vpack.c.b16 %v943, %v941
    %v1306 = vpack.c.b16 %v944, %v942
    %v1307 = vpack.c.b16 %v947, %v945
    %v1308 = vpack.c.b16 %v948, %v946
    %v1309 = vpack.c.b16 %v951, %v949
    %v1310 = vpack.c.b16 %v952, %v950
    %v1311 = vpack.c.b16 %v955, %v953
    %v1312 = vpack.c.b16 %v956, %v954
    %v1313 = vpack.c.b16 %v959, %v957
    %v1314 = vpack.c.b16 %v960, %v958
    %v1315 = vpack.c.b16 %v963, %v961
    %v1316 = vpack.c.b16 %v964, %v962
    %v1317 = vpack.c.b16 %v967, %v965
    %v1318 = vpack.c.b16 %v968, %v966
    %v1319 = vpack.c.b16 %v971, %v969
    %v1320 = vpack.c.b16 %v972, %v970
    %v1321 = vpack.c.b16 %v975, %v973
    %v1322 = vpack.c.b16 %v976, %v974
    %v1323 = vpack.c.b16 %v979, %v977
    %v1324 = vpack.c.b16 %v980, %v978
    %v1325 = vpack.c.b16 %v983, %v981
    %v1326 = vpack.c.b16 %v984, %v982
    %v1327 = vpack.c.b16 %v987, %v985
    %v1328 = vpack.c.b16 %v988, %v986
    %v1329 = vpack.c.b16 %v991, %v989
    %v1330 = vpack.c.b16 %v992, %v990
    %v1331 = vpack.c.b16 %v995, %v993
    %v1332 = vpack.c.b16 %v996, %v994
    %v1333 = vpack.c.b16 %v999, %v997
    %v1334 = vpack.c.b16 %v1000, %v998
    %v1335 = vpack.c.b16 %v1003, %v1001
    %v1336 = vpack.c.b16 %v1004, %v1002
    %v1337 = vpack.c.b16 %v1007, %v1005
    %v1338 = vpack.c.b16 %v1008, %v1006
    %v1339 = vpack.c.b16 %v1011, %v1009
    %v1340 = vpack.c.b16 %v1012, %v1010
    %v1341 = vpack.c.b16 %v1015, %v1013
    %v1342 = vpack.c.b16 %v1016, %v1014
    %v1343 = vpack.c.b16 %v1019, %v1017
    %v1344 = vpack.c.b16 %v1020, %v1018
    %v1345 = vpack.c.b16 %v1023, %v1021
    %v1346 = vpack.c.b16 %v1024, %v1022
    %v1347 = vpack.c.b16 %v1027, %v1025
    %v1348 = vpack.c.b16 %v1028, %v1026
    %v1349 = vpack.c.b16 %v1031, %v1029
    %v1350 = vpack.c.b16 %v1032, %v1030
    %v1351 = vpack.c.b16 %v1035, %v1033
    %v1352 = vpack.c.b16 %v1036, %v1034
    %v1353 = vpack.c.b16 %v1039, %v1037
    %v1354 = vpack.c.b16 %v1040, %v1038
    %v1355 = vpack.c.b16 %v1043, %v1041
    %v1356 = vpack.c.b16 %v1044, %v1042
    %v1357 = vpack.c.b16 %v1047, %v1045
    %v1358 = vpack.c.b16 %v1048, %v1046
    %v1359 = vpack.c.b16 %v1051, %v1049
    %v1360 = vpack.c.b16 %v1052, %v1050
    %v1361 = vpack.c.b16 %v1055, %v1053
    %v1362 = vpack.c.b16 %v1056, %v1054
    %v1363 = vpack.c.b16 %v1059, %v1057
    %v1364 = vpack.c.b16 %v1060, %v1058
    %v1365 = vpack.c.b16 %v1063, %v1061
    %v1366 = vpack.c.b16 %v1064, %v1062
    %v1367 = vpack.c.b16 %v1067, %v1065
    %v1368 = vpack.c.b16 %v1068, %v1066
    %v1369 = vpack.c.b16 %v1071, %v1069
    %v1370 = vpack.c.b16 %v1072, %v1070
    %v1371 = vpack.c.b16 %v1075, %v1073
    %v1372 = vpack.c.b16 %v1076, %v1074
    %v1373 = vpack.c.b16 %v1079, %v1077
    %v1374 = vpack.c.b16 %v1080, %v1078
    %v1375 = vpack.c.b16 %v1083, %v1081
    %v1376 = vpack.c.b16 %v1084, %v1082
    %v1377 = vpack.c.b16 %v1087, %v1085
    %v1378 = vpack.c.b16 %v1088, %v1086
    %v1379 = vpack.c.b16 %v1091, %v1089
    %v1380 = vpack.c.b16 %v1092, %v1090
    %v1381 = vpack.c.b16 %v1095, %v1093
    %v1382 = vpack.c.b16 %v1096, %v1094
    %v1383 = vpack.c.b16 %v1099, %v1097
    %v1384 = vpack.c.b16 %v1100, %v1098
    %v1385 = vpack.c.b16 %v1103, %v1101
    %v1386 = vpack.c.b16 %v1104, %v1102
    %v1387 = vpack.c.b16 %v1107, %v1105
    %v1388 = vpack.c.b16 %v1108, %v1106
    %v1389 = vpack.c.b16 %v1111, %v1109
    %v1390 = vpack.c.b16 %v1112, %v1110
    %v1391 = vpack.c.b16 %v1115, %v1113
    %v1392 = vpack.c.b16 %v1116, %v1114
    %v1393 = vpack.c.b16 %v1119, %v1117
    %v1394 = vpack.c.b16 %v1120, %v1118
    %v1395 = vpack.c.b16 %v1123, %v1121
    %v1396 = vpack.c.b16 %v1124, %v1122
    %v1397 = vpack.c.b16 %v1127, %v1125
    %v1398 = vpack.c.b16 %v1128, %v1126
    %v1399 = vpack.c.b16 %v1131, %v1129
    %v1400 = vpack.c.b16 %v1132, %v1130
    %v1401 = vpack.c.b16 %v1135, %v1133
    %v1402 = vpack.c.b16 %v1136, %v1134
    %v1403 = vpack.c.b16 %v1139, %v1137
    %v1404 = vpack.c.b16 %v1140, %v1138
    %v1405 = vpack.c.b16 %v1143, %v1141
    %v1406 = vpack.c.b16 %v1144, %v1142
    %v1407 = vpack.c.b16 %v1147, %v1145
    %v1408 = vpack.c.b16 %v1148, %v1146
    %v1409 = vpack.c.b16 %v1151, %v1149
    %v1410 = vpack.c.b16 %v1152, %v1150
    %v1411 = vpack.c.b16 %v1155, %v1153
    %v1412 = vpack.c.b16 %v1156, %v1154
    %1669 = vmatprep.subr.bf16.mxu0 %v1158
    %1670 = vmatpush1.bf16.msra.mxu0 %v1157
    %1671 = vmatprep.subr.bf16.mxu0 %v1160
    %1672 = vmatpush1.bf16.msra.mxu0 %v1159
    %1673 = vmatprep.subr.bf16.mxu0 %v1162
    %1674 = vmatpush1.bf16.msra.mxu0 %v1161
    %1675 = vmatprep.subr.bf16.mxu0 %v1164
    %1676 = vmatpush1.bf16.msra.mxu0 %v1163
    %1677 = vmatprep.subr.bf16.mxu0 %v1166
    %1678 = vmatpush1.bf16.msra.mxu0 %v1165
    %1679 = vmatprep.subr.bf16.mxu0 %v1168
    %1680 = vmatpush1.bf16.msra.mxu0 %v1167
    %1681 = vmatprep.subr.bf16.mxu0 %v1170
    %1682 = vmatpush1.bf16.msra.mxu0 %v1169
    %1683 = vmatprep.subr.bf16.mxu0 %v1172
    %1684 = vmatpush1.bf16.msra.mxu0 %v1171
    %1685 = vmatprep.subr.bf16.mxu0 %v1174
    %1686 = vmatpush1.bf16.msra.mxu0 %v1173
    %1687 = vmatprep.subr.bf16.mxu0 %v1176
    %1688 = vmatpush1.bf16.msra.mxu0 %v1175
    %1689 = vmatprep.subr.bf16.mxu0 %v1178
    %1690 = vmatpush1.bf16.msra.mxu0 %v1177
    %1691 = vmatprep.subr.bf16.mxu0 %v1180
    %1692 = vmatpush1.bf16.msra.mxu0 %v1179
    %1693 = vmatprep.subr.bf16.mxu0 %v1182
    %1694 = vmatpush1.bf16.msra.mxu0 %v1181
    %1695 = vmatprep.subr.bf16.mxu0 %v1184
    %1696 = vmatpush1.bf16.msra.mxu0 %v1183
    %1697 = vmatprep.subr.bf16.mxu0 %v1186
    %1698 = vmatpush1.bf16.msra.mxu0 %v1185
    %1699 = vmatprep.subr.bf16.mxu0 %v1188
    %1700 = vmatpush1.bf16.msra.mxu0 %v1187
    %1701 = vmatprep.mubr.bf16.mxu0 %v118
    %1702 = vmatmul.mubr.bf16.gmra.mrb[0].mxu0 %v117
    %v1703 = vpop.f32.mrb[0].mxu0
    %v1704 = vadd.f32 0.0, %v1703
    %v1705 = vpop.f32.mrb[0].mxu0
    %v1706 = vadd.f32 0.0, %v1705
    %v1707 = vpop.f32.mrb[0].mxu0
    %v1708 = vpop.f32.mrb[0].mxu0
    %1709 = vdwg.mxu0
    %1710 = vmatprep.subr.bf16.mxu0 %v1190
    %1711 = vmatpush1.bf16.msra.mxu0 %v1189
    %1712 = vmatprep.subr.bf16.mxu0 %v1192
    %1713 = vmatpush1.bf16.msra.mxu0 %v1191
    %1714 = vmatprep.subr.bf16.mxu0 %v1194
    %1715 = vmatpush1.bf16.msra.mxu0 %v1193
    %1716 = vmatprep.subr.bf16.mxu0 %v1196
    %1717 = vmatpush1.bf16.msra.mxu0 %v1195
    %1718 = vmatprep.subr.bf16.mxu0 %v1198
    %1719 = vmatpush1.bf16.msra.mxu0 %v1197
    %1720 = vmatprep.subr.bf16.mxu0 %v1200
    %1721 = vmatpush1.bf16.msra.mxu0 %v1199
    %1722 = vmatprep.subr.bf16.mxu0 %v1202
    %1723 = vmatpush1.bf16.msra.mxu0 %v1201
    %1724 = vmatprep.subr.bf16.mxu0 %v1204
    %1725 = vmatpush1.bf16.msra.mxu0 %v1203
    %1726 = vmatprep.subr.bf16.mxu0 %v1206
    %1727 = vmatpush1.bf16.msra.mxu0 %v1205
    %1728 = vmatprep.subr.bf16.mxu0 %v1208
    %1729 = vmatpush1.bf16.msra.mxu0 %v1207
    %1730 = vmatprep.subr.bf16.mxu0 %v1210
    %1731 = vmatpush1.bf16.msra.mxu0 %v1209
    %1732 = vmatprep.subr.bf16.mxu0 %v1212
    %1733 = vmatpush1.bf16.msra.mxu0 %v1211
    %1734 = vmatprep.subr.bf16.mxu0 %v1214
    %1735 = vmatpush1.bf16.msra.mxu0 %v1213
    %1736 = vmatprep.subr.bf16.mxu0 %v1216
    %1737 = vmatpush1.bf16.msra.mxu0 %v1215
    %1738 = vmatprep.subr.bf16.mxu0 %v1218
    %1739 = vmatpush1.bf16.msra.mxu0 %v1217
    %1740 = vmatprep.subr.bf16.mxu0 %v1220
    %1741 = vmatpush1.bf16.msra.mxu0 %v1219
    %1742 = vmatprep.mubr.bf16.mxu0 %v120
    %1743 = vmatmul.mubr.bf16.gmra.mrb[0].mxu0 %v119
    %v1744 = vpop.f32.mrb[0].mxu0
    %v1745 = vadd.f32 %v1704, %v1744
    %v1746 = vpop.f32.mrb[0].mxu0
    %v1747 = vadd.f32 %v1706, %v1746
    %v1748 = vpop.f32.mrb[0].mxu0
    %v1749 = vpop.f32.mrb[0].mxu0
    %1750 = vdwg.mxu0
    %1751 = vmatprep.subr.bf16.mxu0 %v1222
    %1752 = vmatpush1.bf16.msra.mxu0 %v1221
    %1753 = vmatprep.subr.bf16.mxu0 %v1224
    %1754 = vmatpush1.bf16.msra.mxu0 %v1223
    %1755 = vmatprep.subr.bf16.mxu0 %v1226
    %1756 = vmatpush1.bf16.msra.mxu0 %v1225
    %1757 = vmatprep.subr.bf16.mxu0 %v1228
    %1758 = vmatpush1.bf16.msra.mxu0 %v1227
    %1759 = vmatprep.subr.bf16.mxu0 %v1230
    %1760 = vmatpush1.bf16.msra.mxu0 %v1229
    %1761 = vmatprep.subr.bf16.mxu0 %v1232
    %1762 = vmatpush1.bf16.msra.mxu0 %v1231
    %1763 = vmatprep.subr.bf16.mxu0 %v1234
    %1764 = vmatpush1.bf16.msra.mxu0 %v1233
    %1765 = vmatprep.subr.bf16.mxu0 %v1236
    %1766 = vmatpush1.bf16.msra.mxu0 %v1235
    %1767 = vmatprep.subr.bf16.mxu0 %v1238
    %1768 = vmatpush1.bf16.msra.mxu0 %v1237
    %1769 = vmatprep.subr.bf16.mxu0 %v1240
    %1770 = vmatpush1.bf16.msra.mxu0 %v1239
    %1771 = vmatprep.subr.bf16.mxu0 %v1242
    %1772 = vmatpush1.bf16.msra.mxu0 %v1241
    %1773 = vmatprep.subr.bf16.mxu0 %v1244
    %1774 = vmatpush1.bf16.msra.mxu0 %v1243
    %1775 = vmatprep.subr.bf16.mxu0 %v1246
    %1776 = vmatpush1.bf16.msra.mxu0 %v1245
    %1777 = vmatprep.subr.bf16.mxu0 %v1248
    %1778 = vmatpush1.bf16.msra.mxu0 %v1247
    %1779 = vmatprep.subr.bf16.mxu0 %v1250
    %1780 = vmatpush1.bf16.msra.mxu0 %v1249
    %1781 = vmatprep.subr.bf16.mxu0 %v1252
    %1782 = vmatpush1.bf16.msra.mxu0 %v1251
    %1783 = vmatprep.mubr.bf16.mxu0 %v122
    %1784 = vmatmul.mubr.bf16.gmra.mrb[0].mxu0 %v121
    %v1785 = vpop.f32.mrb[0].mxu0
    %v1786 = vadd.f32 %v1745, %v1785
    %v1787 = vpop.f32.mrb[0].mxu0
    %v1788 = vadd.f32 %v1747, %v1787
    %v1789 = vpop.f32.mrb[0].mxu0
    %v1790 = vpop.f32.mrb[0].mxu0
    %1791 = vdwg.mxu0
    %1792 = vmatprep.subr.bf16.mxu0 %v1254
    %1793 = vmatpush1.bf16.msra.mxu0 %v1253
    %1794 = vmatprep.subr.bf16.mxu0 %v1256
    %1795 = vmatpush1.bf16.msra.mxu0 %v1255
    %1796 = vmatprep.subr.bf16.mxu0 %v1258
    %1797 = vmatpush1.bf16.msra.mxu0 %v1257
    %1798 = vmatprep.subr.bf16.mxu0 %v1260
    %1799 = vmatpush1.bf16.msra.mxu0 %v1259
    %1800 = vmatprep.subr.bf16.mxu0 %v1262
    %1801 = vmatpush1.bf16.msra.mxu0 %v1261
    %1802 = vmatprep.subr.bf16.mxu0 %v1264
    %1803 = vmatpush1.bf16.msra.mxu0 %v1263
    %1804 = vmatprep.subr.bf16.mxu0 %v1266
    %1805 = vmatpush1.bf16.msra.mxu0 %v1265
    %1806 = vmatprep.subr.bf16.mxu0 %v1268
    %1807 = vmatpush1.bf16.msra.mxu0 %v1267
    %1808 = vmatprep.subr.bf16.mxu0 %v1270
    %1809 = vmatpush1.bf16.msra.mxu0 %v1269
    %1810 = vmatprep.subr.bf16.mxu0 %v1272
    %1811 = vmatpush1.bf16.msra.mxu0 %v1271
    %1812 = vmatprep.subr.bf16.mxu0 %v1274
    %1813 = vmatpush1.bf16.msra.mxu0 %v1273
    %1814 = vmatprep.subr.bf16.mxu0 %v1276
    %1815 = vmatpush1.bf16.msra.mxu0 %v1275
    %1816 = vmatprep.subr.bf16.mxu0 %v1278
    %1817 = vmatpush1.bf16.msra.mxu0 %v1277
    %1818 = vmatprep.subr.bf16.mxu0 %v1280
    %1819 = vmatpush1.bf16.msra.mxu0 %v1279
    %1820 = vmatprep.subr.bf16.mxu0 %v1282
    %1821 = vmatpush1.bf16.msra.mxu0 %v1281
    %1822 = vmatprep.subr.bf16.mxu0 %v1284
    %1823 = vmatpush1.bf16.msra.mxu0 %v1283
    %1824 = vmatprep.mubr.bf16.mxu0 %v124
    %1825 = vmatmul.mubr.bf16.gmra.mrb[0].mxu0 %v123
    %v1826 = vpop.f32.mrb[0].mxu0
    %v1827 = vadd.f32 %v1786, %v1826
    %v1828 = vpop.f32.mrb[0].mxu0
    %v1829 = vadd.f32 %v1788, %v1828
    %v1830 = vpop.f32.mrb[0].mxu0
    %v1831 = vpop.f32.mrb[0].mxu0
    %1832 = vdwg.mxu0
    %1833 = vmatprep.subr.bf16.mxu0 %v1286
    %1834 = vmatpush1.bf16.msra.mxu0 %v1285
    %1835 = vmatprep.subr.bf16.mxu0 %v1288
    %1836 = vmatpush1.bf16.msra.mxu0 %v1287
    %1837 = vmatprep.subr.bf16.mxu0 %v1290
    %1838 = vmatpush1.bf16.msra.mxu0 %v1289
    %1839 = vmatprep.subr.bf16.mxu0 %v1292
    %1840 = vmatpush1.bf16.msra.mxu0 %v1291
    %1841 = vmatprep.subr.bf16.mxu0 %v1294
    %1842 = vmatpush1.bf16.msra.mxu0 %v1293
    %1843 = vmatprep.subr.bf16.mxu0 %v1296
    %1844 = vmatpush1.bf16.msra.mxu0 %v1295
    %1845 = vmatprep.subr.bf16.mxu0 %v1298
    %1846 = vmatpush1.bf16.msra.mxu0 %v1297
    %1847 = vmatprep.subr.bf16.mxu0 %v1300
    %1848 = vmatpush1.bf16.msra.mxu0 %v1299
    %1849 = vmatprep.subr.bf16.mxu0 %v1302
    %1850 = vmatpush1.bf16.msra.mxu0 %v1301
    %1851 = vmatprep.subr.bf16.mxu0 %v1304
    %1852 = vmatpush1.bf16.msra.mxu0 %v1303
    %1853 = vmatprep.subr.bf16.mxu0 %v1306
    %1854 = vmatpush1.bf16.msra.mxu0 %v1305
    %1855 = vmatprep.subr.bf16.mxu0 %v1308
    %1856 = vmatpush1.bf16.msra.mxu0 %v1307
    %1857 = vmatprep.subr.bf16.mxu0 %v1310
    %1858 = vmatpush1.bf16.msra.mxu0 %v1309
    %1859 = vmatprep.subr.bf16.mxu0 %v1312
    %1860 = vmatpush1.bf16.msra.mxu0 %v1311
    %1861 = vmatprep.subr.bf16.mxu0 %v1314
    %1862 = vmatpush1.bf16.msra.mxu0 %v1313
    %1863 = vmatprep.subr.bf16.mxu0 %v1316
    %1864 = vmatpush1.bf16.msra.mxu0 %v1315
    %1865 = vmatprep.mubr.bf16.mxu0 %v126
    %1866 = vmatmul.mubr.bf16.gmra.mrb[0].mxu0 %v125
    %v1867 = vpop.f32.mrb[0].mxu0
    %v1868 = vadd.f32 %v1827, %v1867
    %v1869 = vpop.f32.mrb[0].mxu0
    %v1870 = vadd.f32 %v1829, %v1869
    %v1871 = vpop.f32.mrb[0].mxu0
    %v1872 = vpop.f32.mrb[0].mxu0
    %1873 = vdwg.mxu0
    %1874 = vmatprep.subr.bf16.mxu0 %v1318
    %1875 = vmatpush1.bf16.msra.mxu0 %v1317
    %1876 = vmatprep.subr.bf16.mxu0 %v1320
    %1877 = vmatpush1.bf16.msra.mxu0 %v1319
    %1878 = vmatprep.subr.bf16.mxu0 %v1322
    %1879 = vmatpush1.bf16.msra.mxu0 %v1321
    %1880 = vmatprep.subr.bf16.mxu0 %v1324
    %1881 = vmatpush1.bf16.msra.mxu0 %v1323
    %1882 = vmatprep.subr.bf16.mxu0 %v1326
    %1883 = vmatpush1.bf16.msra.mxu0 %v1325
    %1884 = vmatprep.subr.bf16.mxu0 %v1328
    %1885 = vmatpush1.bf16.msra.mxu0 %v1327
    %1886 = vmatprep.subr.bf16.mxu0 %v1330
    %1887 = vmatpush1.bf16.msra.mxu0 %v1329
    %1888 = vmatprep.subr.bf16.mxu0 %v1332
    %1889 = vmatpush1.bf16.msra.mxu0 %v1331
    %1890 = vmatprep.subr.bf16.mxu0 %v1334
    %1891 = vmatpush1.bf16.msra.mxu0 %v1333
    %1892 = vmatprep.subr.bf16.mxu0 %v1336
    %1893 = vmatpush1.bf16.msra.mxu0 %v1335
    %1894 = vmatprep.subr.bf16.mxu0 %v1338
    %1895 = vmatpush1.bf16.msra.mxu0 %v1337
    %1896 = vmatprep.subr.bf16.mxu0 %v1340
    %1897 = vmatpush1.bf16.msra.mxu0 %v1339
    %1898 = vmatprep.subr.bf16.mxu0 %v1342
    %1899 = vmatpush1.bf16.msra.mxu0 %v1341
    %1900 = vmatprep.subr.bf16.mxu0 %v1344
    %1901 = vmatpush1.bf16.msra.mxu0 %v1343
    %1902 = vmatprep.subr.bf16.mxu0 %v1346
    %1903 = vmatpush1.bf16.msra.mxu0 %v1345
    %1904 = vmatprep.subr.bf16.mxu0 %v1348
    %1905 = vmatpush1.bf16.msra.mxu0 %v1347
    %1906 = vmatprep.mubr.bf16.mxu0 %v128
    %1907 = vmatmul.mubr.bf16.gmra.mrb[0].mxu0 %v127
    %v1908 = vpop.f32.mrb[0].mxu0
    %v1909 = vadd.f32 %v1868, %v1908
    %v1910 = vpop.f32.mrb[0].mxu0
    %v1911 = vadd.f32 %v1870, %v1910
    %v1912 = vpop.f32.mrb[0].mxu0
    %v1913 = vpop.f32.mrb[0].mxu0
    %1914 = vdwg.mxu0
    %1915 = vmatprep.subr.bf16.mxu0 %v1350
    %1916 = vmatpush1.bf16.msra.mxu0 %v1349
    %1917 = vmatprep.subr.bf16.mxu0 %v1352
    %1918 = vmatpush1.bf16.msra.mxu0 %v1351
    %1919 = vmatprep.subr.bf16.mxu0 %v1354
    %1920 = vmatpush1.bf16.msra.mxu0 %v1353
    %1921 = vmatprep.subr.bf16.mxu0 %v1356
    %1922 = vmatpush1.bf16.msra.mxu0 %v1355
    %1923 = vmatprep.subr.bf16.mxu0 %v1358
    %1924 = vmatpush1.bf16.msra.mxu0 %v1357
    %1925 = vmatprep.subr.bf16.mxu0 %v1360
    %1926 = vmatpush1.bf16.msra.mxu0 %v1359
    %1927 = vmatprep.subr.bf16.mxu0 %v1362
    %1928 = vmatpush1.bf16.msra.mxu0 %v1361
    %1929 = vmatprep.subr.bf16.mxu0 %v1364
    %1930 = vmatpush1.bf16.msra.mxu0 %v1363
    %1931 = vmatprep.subr.bf16.mxu0 %v1366
    %1932 = vmatpush1.bf16.msra.mxu0 %v1365
    %1933 = vmatprep.subr.bf16.mxu0 %v1368
    %1934 = vmatpush1.bf16.msra.mxu0 %v1367
    %1935 = vmatprep.subr.bf16.mxu0 %v1370
    %1936 = vmatpush1.bf16.msra.mxu0 %v1369
    %1937 = vmatprep.subr.bf16.mxu0 %v1372
    %1938 = vmatpush1.bf16.msra.mxu0 %v1371
    %1939 = vmatprep.subr.bf16.mxu0 %v1374
    %1940 = vmatpush1.bf16.msra.mxu0 %v1373
    %1941 = vmatprep.subr.bf16.mxu0 %v1376
    %1942 = vmatpush1.bf16.msra.mxu0 %v1375
    %1943 = vmatprep.subr.bf16.mxu0 %v1378
    %1944 = vmatpush1.bf16.msra.mxu0 %v1377
    %1945 = vmatprep.subr.bf16.mxu0 %v1380
    %1946 = vmatpush1.bf16.msra.mxu0 %v1379
    %1947 = vmatprep.mubr.bf16.mxu0 %v130
    %1948 = vmatmul.mubr.bf16.gmra.mrb[0].mxu0 %v129
    %v1949 = vpop.f32.mrb[0].mxu0
    %v1950 = vadd.f32 %v1909, %v1949
    %v1951 = vpop.f32.mrb[0].mxu0
    %v1952 = vadd.f32 %v1911, %v1951
    %v1953 = vpop.f32.mrb[0].mxu0
    %v1954 = vpop.f32.mrb[0].mxu0
    %1955 = vdwg.mxu0
    %1956 = vmatprep.subr.bf16.mxu0 %v1382
    %1957 = vmatpush1.bf16.msra.mxu0 %v1381
    %1958 = vmatprep.subr.bf16.mxu0 %v1384
    %1959 = vmatpush1.bf16.msra.mxu0 %v1383
    %1960 = vmatprep.subr.bf16.mxu0 %v1386
    %1961 = vmatpush1.bf16.msra.mxu0 %v1385
    %1962 = vmatprep.subr.bf16.mxu0 %v1388
    %1963 = vmatpush1.bf16.msra.mxu0 %v1387
    %1964 = vmatprep.subr.bf16.mxu0 %v1390
    %1965 = vmatpush1.bf16.msra.mxu0 %v1389
    %1966 = vmatprep.subr.bf16.mxu0 %v1392
    %1967 = vmatpush1.bf16.msra.mxu0 %v1391
    %1968 = vmatprep.subr.bf16.mxu0 %v1394
    %1969 = vmatpush1.bf16.msra.mxu0 %v1393
    %1970 = vmatprep.subr.bf16.mxu0 %v1396
    %1971 = vmatpush1.bf16.msra.mxu0 %v1395
    %1972 = vmatprep.subr.bf16.mxu0 %v1398
    %1973 = vmatpush1.bf16.msra.mxu0 %v1397
    %1974 = vmatprep.subr.bf16.mxu0 %v1400
    %1975 = vmatpush1.bf16.msra.mxu0 %v1399
    %1976 = vmatprep.subr.bf16.mxu0 %v1402
    %1977 = vmatpush1.bf16.msra.mxu0 %v1401
    %1978 = vmatprep.subr.bf16.mxu0 %v1404
    %1979 = vmatpush1.bf16.msra.mxu0 %v1403
    %1980 = vmatprep.subr.bf16.mxu0 %v1406
    %1981 = vmatpush1.bf16.msra.mxu0 %v1405
    %1982 = vmatprep.subr.bf16.mxu0 %v1408
    %1983 = vmatpush1.bf16.msra.mxu0 %v1407
    %1984 = vmatprep.subr.bf16.mxu0 %v1410
    %1985 = vmatpush1.bf16.msra.mxu0 %v1409
    %1986 = vmatprep.subr.bf16.mxu0 %v1412
    %1987 = vmatpush1.bf16.msra.mxu0 %v1411
    %1988 = vmatprep.mubr.bf16.mxu0 %v132
    %1989 = vmatmul.mubr.bf16.gmra.mrb[0].mxu0 %v131
    %v1990 = vpop.f32.mrb[0].mxu0
    %v1991 = vadd.f32 %v1950, %v1990
    %v1992 = vpop.f32.mrb[0].mxu0
    %v1993 = vadd.f32 %v1952, %v1992
    %v1994 = vpop.f32.mrb[0].mxu0
    %v1995 = vpop.f32.mrb[0].mxu0
    %1996 = vdwg.mxu0
    %v1997 = vmul.f32 %v1991, %v116
    %v1998 = vmul.f32 %v1993, %v116
    %v1999 = vrot.slane %v1997, 4
    %v2000 = vadd.f32 %v1997, %v1999
    %v2001 = vrot.slane %v2000, 2
    %v2002 = vadd.f32 %v2000, %v2001
    %v2003 = vrot.slane %v2002, 1
    %v2004 = vadd.f32 %v2002, %v2003
    %v2005 = vrot.slane %v1998, 4
    %v2006 = vadd.f32 %v1998, %v2005
    %v2007 = vrot.slane %v2006, 2
    %v2008 = vadd.f32 %v2006, %v2007
    %v2009 = vrot.slane %v2008, 1
    %v2010 = vadd.f32 %v2008, %v2009
    %v2011 = vrcp.pop 8.0
    %v2012 = vmul.f32 %v2004, %v2011
    %v2013 = vmul.f32 %v2010, %v2011
    %v2014 = vsub.f32 %v1997, %v2012
    %v2015 = vsub.f32 %v1998, %v2013
    %v2016 = vmul.f32 %v2014, %v2014
    %v2017 = vmul.f32 %v2015, %v2015
    %v2018 = vrot.slane %v2016, 4
    %v2019 = vadd.f32 %v2016, %v2018
    %v2020 = vrot.slane %v2019, 2
    %v2021 = vadd.f32 %v2019, %v2020
    %v2022 = vrot.slane %v2021, 1
    %v2023 = vadd.f32 %v2021, %v2022
    %v2024 = vrot.slane %v2017, 4
    %v2025 = vadd.f32 %v2017, %v2024
    %v2026 = vrot.slane %v2025, 2
    %v2027 = vadd.f32 %v2025, %v2026
    %v2028 = vrot.slane %v2027, 1
    %v2029 = vadd.f32 %v2027, %v2028
    %v2030 = vmul.f32 %v2023, %v2011
    %v2031 = vmul.f32 %v2029, %v2011
    %v2032 = vadd.f32 %v2030, 1e-05
    %v2033 = vadd.f32 %v2031, 1e-05
    %v2034 = vrsqrt.pop %v2032
    %v2035 = vrsqrt.pop %v2033
    %v2036 = vmul.f32 %v2014, %v2034
    %v2037 = vmul.f32 %v2015, %v2035
    %v2038 = vld [vmem:[%s2] sm:$0x3]
    %v2040 = vlaneseq
    %v2041 = vshrl.u32 %v2040, 7
    %v2042 = vsub.s32 0, %v2041
    %v2043 = vrot.slane %v2038, %v2042
    %v2044 = vlaneseq
    %v2045 = vshrl.u32 %v2044, 7
    %v2046 = vsub.s32 1, %v2045
    %v2047 = vrot.slane %v2038, %v2046
    %v2050 = vmul.f32 %v2036, %v2043
    %v2051 = vmul.f32 %v2037, %v2047
    %v2052 = vld [vmem:[%s3] sm:$0x3]
    %v2054 = vlaneseq
    %v2055 = vshrl.u32 %v2054, 7
    %v2056 = vsub.s32 0, %v2055
    %v2057 = vrot.slane %v2052, %v2056
    %v2058 = vlaneseq
    %v2059 = vshrl.u32 %v2058, 7
    %v2060 = vsub.s32 1, %v2059
    %v2061 = vrot.slane %v2052, %v2060
    %v2064 = vadd.f32 %v2050, %v2057
    %v2065 = vadd.f32 %v2051, %v2061
    %v2066 = vmax.f32 %v2064, 0.0
    %v2067 = vmax.f32 %v2065, 0.0
    %v2068 = vpack.c.bf16 %v2066, %v2066
    %v2069 = vpack.c.bf16 %v2067, %v2067
    %v2070 = vld [vmem:[#allocation7] sm:$0xff]
    %v2071 = vld [vmem:[#allocation7 + $0x8] sm:$0xff]
    %v2072 = vld [vmem:[#allocation7 + $0x10] sm:$0xff]
    %v2073 = vld [vmem:[#allocation7 + $0x18] sm:$0xff]
    %v2074 = vld [vmem:[#allocation7 + $0x20] sm:$0xff]
    %v2075 = vld [vmem:[#allocation7 + $0x28] sm:$0xff]
    %v2076 = vld [vmem:[#allocation7 + $0x30] sm:$0xff]
    %v2077 = vld [vmem:[#allocation7 + $0x38] sm:$0xff]
    %v2078 = vld [vmem:[#allocation7 + $0x40] sm:$0xff]
    %v2079 = vld [vmem:[#allocation7 + $0x48] sm:$0xff]
    %v2080 = vld [vmem:[#allocation7 + $0x50] sm:$0xff]
    %v2081 = vld [vmem:[#allocation7 + $0x58] sm:$0xff]
    %v2082 = vld [vmem:[#allocation7 + $0x60] sm:$0xff]
    %v2083 = vld [vmem:[#allocation7 + $0x68] sm:$0xff]
    %v2084 = vld [vmem:[#allocation7 + $0x70] sm:$0xff]
    %v2085 = vld [vmem:[#allocation7 + $0x78] sm:$0xff]
    %v2086 = vld [vmem:[#allocation7 + $0x80] sm:$0xff]
    %v2087 = vld [vmem:[#allocation7 + $0x88] sm:$0xff]
    %v2088 = vld [vmem:[#allocation7 + $0x90] sm:$0xff]
    %v2089 = vld [vmem:[#allocation7 + $0x98] sm:$0xff]
    %v2090 = vld [vmem:[#allocation7 + $0xa0] sm:$0xff]
    %v2091 = vld [vmem:[#allocation7 + $0xa8] sm:$0xff]
    %v2092 = vld [vmem:[#allocation7 + $0xb0] sm:$0xff]
    %v2093 = vld [vmem:[#allocation7 + $0xb8] sm:$0xff]
    %v2094 = vld [vmem:[#allocation7 + $0xc0] sm:$0xff]
    %v2095 = vld [vmem:[#allocation7 + $0xc8] sm:$0xff]
    %v2096 = vld [vmem:[#allocation7 + $0xd0] sm:$0xff]
    %v2097 = vld [vmem:[#allocation7 + $0xd8] sm:$0xff]
    %v2098 = vld [vmem:[#allocation7 + $0xe0] sm:$0xff]
    %v2099 = vld [vmem:[#allocation7 + $0xe8] sm:$0xff]
    %v2100 = vld [vmem:[#allocation7 + $0xf0] sm:$0xff]
    %v2101 = vld [vmem:[#allocation7 + $0xf8] sm:$0xff]
    %v2134 = vunpack.c.l.b16 %v2070
    %v2135 = vunpack.c.h.b16 %v2070
    %v2136 = vunpack.c.l.b16 %v2071
    %v2137 = vunpack.c.h.b16 %v2071
    %v2138 = vunpack.c.l.b16 %v2072
    %v2139 = vunpack.c.h.b16 %v2072
    %v2140 = vunpack.c.l.b16 %v2073
    %v2141 = vunpack.c.h.b16 %v2073
    %v2142 = vunpack.c.l.b16 %v2074
    %v2143 = vunpack.c.h.b16 %v2074
    %v2144 = vunpack.c.l.b16 %v2075
    %v2145 = vunpack.c.h.b16 %v2075
    %v2146 = vunpack.c.l.b16 %v2076
    %v2147 = vunpack.c.h.b16 %v2076
    %v2148 = vunpack.c.l.b16 %v2077
    %v2149 = vunpack.c.h.b16 %v2077
    %v2150 = vunpack.c.l.b16 %v2078
    %v2151 = vunpack.c.h.b16 %v2078
    %v2152 = vunpack.c.l.b16 %v2079
    %v2153 = vunpack.c.h.b16 %v2079
    %v2154 = vunpack.c.l.b16 %v2080
    %v2155 = vunpack.c.h.b16 %v2080
    %v2156 = vunpack.c.l.b16 %v2081
    %v2157 = vunpack.c.h.b16 %v2081
    %v2158 = vunpack.c.l.b16 %v2082
    %v2159 = vunpack.c.h.b16 %v2082
    %v2160 = vunpack.c.l.b16 %v2083
    %v2161 = vunpack.c.h.b16 %v2083
    %v2162 = vunpack.c.l.b16 %v2084
    %v2163 = vunpack.c.h.b16 %v2084
    %v2164 = vunpack.c.l.b16 %v2085
    %v2165 = vunpack.c.h.b16 %v2085
    %v2166 = vunpack.c.l.b16 %v2086
    %v2167 = vunpack.c.h.b16 %v2086
    %v2168 = vunpack.c.l.b16 %v2087
    %v2169 = vunpack.c.h.b16 %v2087
    %v2170 = vunpack.c.l.b16 %v2088
    %v2171 = vunpack.c.h.b16 %v2088
    %v2172 = vunpack.c.l.b16 %v2089
    %v2173 = vunpack.c.h.b16 %v2089
    %v2174 = vunpack.c.l.b16 %v2090
    %v2175 = vunpack.c.h.b16 %v2090
    %v2176 = vunpack.c.l.b16 %v2091
    %v2177 = vunpack.c.h.b16 %v2091
    %v2178 = vunpack.c.l.b16 %v2092
    %v2179 = vunpack.c.h.b16 %v2092
    %v2180 = vunpack.c.l.b16 %v2093
    %v2181 = vunpack.c.h.b16 %v2093
    %v2182 = vunpack.c.l.b16 %v2094
    %v2183 = vunpack.c.h.b16 %v2094
    %v2184 = vunpack.c.l.b16 %v2095
    %v2185 = vunpack.c.h.b16 %v2095
    %v2186 = vunpack.c.l.b16 %v2096
    %v2187 = vunpack.c.h.b16 %v2096
    %v2188 = vunpack.c.l.b16 %v2097
    %v2189 = vunpack.c.h.b16 %v2097
    %v2190 = vunpack.c.l.b16 %v2098
    %v2191 = vunpack.c.h.b16 %v2098
    %v2192 = vunpack.c.l.b16 %v2099
    %v2193 = vunpack.c.h.b16 %v2099
    %v2194 = vunpack.c.l.b16 %v2100
    %v2195 = vunpack.c.h.b16 %v2100
    %v2196 = vunpack.c.l.b16 %v2101
    %v2197 = vunpack.c.h.b16 %v2101
    %v2198 = vpack.c.b16 %v2136, %v2134
    %v2199 = vpack.c.b16 %v2137, %v2135
    %v2200 = vpack.c.b16 %v2140, %v2138
    %v2201 = vpack.c.b16 %v2141, %v2139
    %v2202 = vpack.c.b16 %v2144, %v2142
    %v2203 = vpack.c.b16 %v2145, %v2143
    %v2204 = vpack.c.b16 %v2148, %v2146
    %v2205 = vpack.c.b16 %v2149, %v2147
    %v2206 = vpack.c.b16 %v2152, %v2150
    %v2207 = vpack.c.b16 %v2153, %v2151
    %v2208 = vpack.c.b16 %v2156, %v2154
    %v2209 = vpack.c.b16 %v2157, %v2155
    %v2210 = vpack.c.b16 %v2160, %v2158
    %v2211 = vpack.c.b16 %v2161, %v2159
    %v2212 = vpack.c.b16 %v2164, %v2162
    %v2213 = vpack.c.b16 %v2165, %v2163
    %v2214 = vpack.c.b16 %v2168, %v2166
    %v2215 = vpack.c.b16 %v2169, %v2167
    %v2216 = vpack.c.b16 %v2172, %v2170
    %v2217 = vpack.c.b16 %v2173, %v2171
    %v2218 = vpack.c.b16 %v2176, %v2174
    %v2219 = vpack.c.b16 %v2177, %v2175
    %v2220 = vpack.c.b16 %v2180, %v2178
    %v2221 = vpack.c.b16 %v2181, %v2179
    %v2222 = vpack.c.b16 %v2184, %v2182
    %v2223 = vpack.c.b16 %v2185, %v2183
    %v2224 = vpack.c.b16 %v2188, %v2186
    %v2225 = vpack.c.b16 %v2189, %v2187
    %v2226 = vpack.c.b16 %v2192, %v2190
    %v2227 = vpack.c.b16 %v2193, %v2191
    %v2228 = vpack.c.b16 %v2196, %v2194
    %v2229 = vpack.c.b16 %v2197, %v2195
    %2262 = vmatprep.subr.bf16.mxu0 %v2199
    %2263 = vmatpush1.bf16.msra.mxu0 %v2198
    %2264 = vmatprep.subr.bf16.mxu0 %v2201
    %2265 = vmatpush1.bf16.msra.mxu0 %v2200
    %2266 = vmatprep.subr.bf16.mxu0 %v2203
    %2267 = vmatpush1.bf16.msra.mxu0 %v2202
    %2268 = vmatprep.subr.bf16.mxu0 %v2205
    %2269 = vmatpush1.bf16.msra.mxu0 %v2204
    %2270 = vmatprep.subr.bf16.mxu0 %v2207
    %2271 = vmatpush1.bf16.msra.mxu0 %v2206
    %2272 = vmatprep.subr.bf16.mxu0 %v2209
    %2273 = vmatpush1.bf16.msra.mxu0 %v2208
    %2274 = vmatprep.subr.bf16.mxu0 %v2211
    %2275 = vmatpush1.bf16.msra.mxu0 %v2210
    %2276 = vmatprep.subr.bf16.mxu0 %v2213
    %2277 = vmatpush1.bf16.msra.mxu0 %v2212
    %2278 = vmatprep.subr.bf16.mxu0 %v2215
    %2279 = vmatpush1.bf16.msra.mxu0 %v2214
    %2280 = vmatprep.subr.bf16.mxu0 %v2217
    %2281 = vmatpush1.bf16.msra.mxu0 %v2216
    %2282 = vmatprep.subr.bf16.mxu0 %v2219
    %2283 = vmatpush1.bf16.msra.mxu0 %v2218
    %2284 = vmatprep.subr.bf16.mxu0 %v2221
    %2285 = vmatpush1.bf16.msra.mxu0 %v2220
    %2286 = vmatprep.subr.bf16.mxu0 %v2223
    %2287 = vmatpush1.bf16.msra.mxu0 %v2222
    %2288 = vmatprep.subr.bf16.mxu0 %v2225
    %2289 = vmatpush1.bf16.msra.mxu0 %v2224
    %2290 = vmatprep.subr.bf16.mxu0 %v2227
    %2291 = vmatpush1.bf16.msra.mxu0 %v2226
    %2292 = vmatprep.subr.bf16.mxu0 %v2229
    %2293 = vmatpush1.bf16.msra.mxu0 %v2228
    %2294 = vmatprep.mubr.bf16.mxu0 %v2069
    %2295 = vmatmul.mubr.bf16.gmra.mrb[0].mxu0 %v2068
    %v2296 = vpop.f32.mrb[0].mxu0
    %v2297 = vadd.f32 0.0, %v2296
    %v2298 = vpop.f32.mrb[0].mxu0
    %v2299 = vadd.f32 0.0, %v2298
    %v2300 = vpop.f32.mrb[0].mxu0
    %v2301 = vpop.f32.mrb[0].mxu0
    %2302 = vdwg.mxu0
    %v2303 = vrot.slane %v2297, 4
    %v2304 = vadd.f32 %v2297, %v2303
    %v2305 = vrot.slane %v2304, 2
    %v2306 = vadd.f32 %v2304, %v2305
    %v2307 = vrot.slane %v2306, 1
    %v2308 = vadd.f32 %v2306, %v2307
    %v2309 = vrot.slane %v2299, 4
    %v2310 = vadd.f32 %v2299, %v2309
    %v2311 = vrot.slane %v2310, 2
    %v2312 = vadd.f32 %v2310, %v2311
    %v2313 = vrot.slane %v2312, 1
    %v2314 = vadd.f32 %v2312, %v2313
    %v2315 = vmul.f32 %v2308, %v2011
    %v2316 = vmul.f32 %v2314, %v2011
    %v2317 = vsub.f32 %v2297, %v2315
    %v2318 = vsub.f32 %v2299, %v2316
    %v2319 = vmul.f32 %v2317, %v2317
    %v2320 = vmul.f32 %v2318, %v2318
    %v2321 = vrot.slane %v2319, 4
    %v2322 = vadd.f32 %v2319, %v2321
    %v2323 = vrot.slane %v2322, 2
    %v2324 = vadd.f32 %v2322, %v2323
    %v2325 = vrot.slane %v2324, 1
    %v2326 = vadd.f32 %v2324, %v2325
    %v2327 = vrot.slane %v2320, 4
    %v2328 = vadd.f32 %v2320, %v2327
    %v2329 = vrot.slane %v2328, 2
    %v2330 = vadd.f32 %v2328, %v2329
    %v2331 = vrot.slane %v2330, 1
    %v2332 = vadd.f32 %v2330, %v2331
    %v2333 = vmul.f32 %v2326, %v2011
    %v2334 = vmul.f32 %v2332, %v2011
    %v2335 = vadd.f32 %v2333, 1e-05
    %v2336 = vadd.f32 %v2334, 1e-05
    %v2337 = vrsqrt.pop %v2335
    %v2338 = vrsqrt.pop %v2336
    %v2339 = vmul.f32 %v2317, %v2337
    %v2340 = vmul.f32 %v2318, %v2338
    %v2341 = vld [vmem:[%s5] sm:$0x3]
    %v2343 = vlaneseq
    %v2344 = vshrl.u32 %v2343, 7
    %v2345 = vsub.s32 0, %v2344
    %v2346 = vrot.slane %v2341, %v2345
    %v2347 = vlaneseq
    %v2348 = vshrl.u32 %v2347, 7
    %v2349 = vsub.s32 1, %v2348
    %v2350 = vrot.slane %v2341, %v2349
    %v2353 = vmul.f32 %v2339, %v2346
    %v2354 = vmul.f32 %v2340, %v2350
    %v2355 = vld [vmem:[%s6] sm:$0x3]
    %v2357 = vlaneseq
    %v2358 = vshrl.u32 %v2357, 7
    %v2359 = vsub.s32 0, %v2358
    %v2360 = vrot.slane %v2355, %v2359
    %v2361 = vlaneseq
    %v2362 = vshrl.u32 %v2361, 7
    %v2363 = vsub.s32 1, %v2362
    %v2364 = vrot.slane %v2355, %v2363
    %v2367 = vadd.f32 %v2353, %v2360
    %v2368 = vadd.f32 %v2354, %v2364
    %v2369 = vmul.f32 %v2367, %v2367
    %v2370 = vmul.f32 %v2368, %v2368
    %v2371 = vadd.f32 %v2369, %v2370
    %2372 = vadd.xlane.f32.xlu0 %v2371
    %v2373 = vpop.xlane.xlu0 %2372
    %v2374 = vmax.f32 %v2373, 1e-24
    %v2375 = vrsqrt.pop %v2374
    %v2376 = vmul.f32 %v2367, %v2375
    %v2377 = vmul.f32 %v2368, %v2375
    %v2378 = vrot.slane %v2376, 4
    %v2379 = vrot.slane %v2377, 4
    %v2380 = vsub.f32 %v2376, %v2378
    %v2381 = vsub.f32 %v2377, %v2379
    %v2382 = vmul.f32 %v2380, %v2380
    %v2383 = vmul.f32 %v2381, %v2381
    %v2384 = vadd.f32 %v2382, %v2383
    %2385 = vadd.xlane.f32.xlu0 %v2384
    %v2386 = vpop.xlane.xlu0 %2385
    %v2387 = vrsqrt.pop %v2386
    %v2388 = vmul.f32 %v2386, %v2387
    %vm2389 = vcmp.eq.f32.partialorder %v2386, inf
    %v2390 = vsel %vm2389, %v2386, %v2388
    %vm2391 = vcmp.eq.f32.partialorder %v2386, 0.0
    %v2392 = vand.u32 %v2386, 2147483648
    %v2393 = vsel %vm2391, %v2392, %v2390
    %vm2394 = vcmask 7168
    %v2395 = vsel %vm2394, %v2393, 0.0
    %2396 = vadd.xlane.f32.xlu0 %v2395
    %v2397 = vpop.xlane.xlu0 %2396
    %v2398 = vrot.slane %v2397, 4
    %v2399 = vadd.f32 %v2397, %v2398
    %v2400 = vrot.slane %v2399, 2
    %v2401 = vadd.f32 %v2399, %v2400
    %v2402 = vrot.slane %v2401, 1
    %v2403 = vadd.f32 %v2401, %v2402
    %s2404 = vtos %v2403
    %v2405 = vrcp.pop 8.0
    %s2406 = vtos %v2405
    %s2407 = smul.f32 %s2404, %s2406
    %s2408 = sadd.f32 %s2407, 0.0
    %s2409 = scalar_lea.smem [#allocation8], 0
    %2410 = sst [smem:[%s2409]] %s2408
    // Predicated region
    $region42: #{tpu_custom_call.1} parent=1 // pred_check
      _
    $region43: #{tpu_custom_call.1} parent=1 // pred_check_branch
      %2412 = sbr.rel (0) target = $region45
    $region44: #{tpu_custom_call.1} parent=1 // pred_region
      %s2414 = ssub.s32 16, 16
      %2415 = vsyncadd [#allocation4], %s2414
      %2418 = dma.smem_to_hbm [#allocation8], 16, %s7, [#allocation4]
    $region45: #{tpu_custom_call.1} parent=1 // pred_fallthru
      _
    // Predicated region
    $region46: #{tpu_custom_call.1} parent=1 // pred_check
      _
    $region47: #{tpu_custom_call.1} parent=1 // pred_check_branch
      %2420 = sbr.rel (0) target = $region49
    $region48: #{tpu_custom_call.1} parent=1 // pred_region
      %2421 = dma.done [#allocation4], 16
    $region49: #{tpu_custom_call.1} parent=1 // pred_fallthru
      _
    %2422 = sfence
    %2423 = vsyncpa [#allocation3], 1
    %2424 = vsyncpa [#allocation6], 1
    %2425 = vsyncpa [#allocation4], 1

</llo_original>
